<compile_context>
chip_gen: v7x
topology: tpu7x:2x2x1
jax: 0.10.0
libtpu: 0.0.40
codegen_flags: <defaults>
</compile_context>

<pallas_src>
import functools
import math

import jax
import jax.numpy as jnp
from jax.experimental import pallas as pl
from jax.experimental.pallas import tpu as pltpu

# Constants standing in for `global_variables` in the reference PyTorch code.
LRELU_NEG_SLOPE = 0.0      # 0.0 -> nn.ReLU, otherwise LeakyReLU(negative_slope)
MIX_ACTIVATE_TANH = True   # True -> nn.Tanh for the "mix" activation
EPS_CNST = 1e-6


def _act(x):
    if LRELU_NEG_SLOPE == 0.0:
        return jnp.maximum(x, 0.0)
    return jnp.where(x >= 0.0, x, LRELU_NEG_SLOPE * x)


def _mix_act(x):
    return jnp.tanh(x) if MIX_ACTIVATE_TANH else _act(x)


def _gatqn_kernel(adj_ref, node_ref, edge_ref,
                  wen_ref, wee_ref, wnp_ref, wep_ref, wagg_ref, vec_ref,
                  out_ref, *, mix_dtype):
    BT, N, _ = adj_ref.shape
    An = wen_ref.shape[0]
    Ae = wee_ref.shape[0]
    D = wen_ref.shape[1]
    f32 = jnp.float32
    bf16 = jnp.bfloat16

    adj = adj_ref[...].astype(f32)                          # (BT, N, N) 0/1 mask
    node_attr = node_ref[...].reshape(BT * N, An)           # (BT*N, An)    bf16
    edge_attr = edge_ref[...].reshape(BT * N * N, Ae)       # (BT*N*N, Ae)  bf16, e = i*N + j

    b_node = vec_ref[0:1, :D]
    b_edge = vec_ref[1:2, :D]
    b_agg = vec_ref[2:3, :D]
    w_mlp_n = vec_ref[3:4, :D]
    w_mlp_e = vec_ref[4:5, :D]

    # node / edge embeddings (bf16 MXU operands, f32 accumulation)
    node_vec = _act(jnp.dot(node_attr, wen_ref[...], preferred_element_type=f32)
                    + b_node)                                                    # (BT*N, D)   f32
    edge_vec = _act(jnp.dot(edge_attr, wee_ref[...], preferred_element_type=f32)
                    + b_edge)                                                    # (BT*N*N, D) f32
    node_vec_b = node_vec.astype(bf16)
    edge_vec_b = edge_vec.astype(bf16)

    # mu_attention_node(cat(node_i, edge_ij, node_j)) decomposed into per-node and
    # per-edge projections so the (BT,N,N,3D) concat tensor is never materialized.
    np_proj = jnp.dot(node_vec_b, wnp_ref[...], preferred_element_type=f32)      # (BT*N, 2D)
    ep_proj = jnp.dot(edge_vec_b, wep_ref[...], preferred_element_type=f32)      # (BT*N*N, 2D)
    same_c = np_proj[:, :D].reshape(BT, N, 1, D)      # varies with source node i
    diff_c = np_proj[:, D:].reshape(BT, 1, N, D)      # varies with neighbor node j
    edge_c = ep_proj[:, :D].reshape(BT, N, N, D)

    # mix activation (tanh): bf16 on v6e/v7x (packed EUP), f32 on older gens.
    att_n = _mix_act((edge_c + same_c + diff_c).astype(mix_dtype))               # (BT,N,N,D)
    att_e = _mix_act(ep_proj[:, D:].reshape(BT, N, N, D).astype(mix_dtype))      # (BT,N,N,D)

    # mlp_node / mlp_edge -> scalar logits (VPU mul + lane reduce; an MXU variant only
    # pays off once a bundle dump shows VPU/XLU saturation).
    logit_n = jnp.sum(att_n.astype(f32) * w_mlp_n, axis=-1)    # (BT, N, N)
    logit_e = jnp.sum(att_e.astype(f32) * w_mlp_e, axis=-1)    # (BT, N, N)

    # adj-masked, exp-normalized attention (no max-subtraction: matches the reference;
    # tanh-bounded logits cannot overflow f32 exp here).
    attw_n = adj * jnp.exp(logit_n)
    inv_n = 1.0 / jnp.maximum(jnp.sum(attw_n, axis=2, keepdims=True), EPS_CNST)
    attw_n = attw_n * inv_n
    attw_e = adj * jnp.exp(logit_e)
    inv_e = 1.0 / jnp.maximum(jnp.sum(attw_e, axis=2, keepdims=True), EPS_CNST)
    attw_e = attw_e * inv_e

    # aggregation: both neighbor sums go through the (idle) MXU in f32; no (BT,N,N,D)
    # broadcast product is materialized.
    node_vec_3d = node_vec.reshape(BT, N, D)
    sum_adj_node = jnp.einsum('bij,bjd->bid', attw_n, node_vec_3d,
                              preferred_element_type=f32).reshape(BT * N, D)
    edge_vec_3d = edge_vec.reshape(BT * N, N, D)
    sum_adj_edge = jnp.einsum('xqj,xjd->xqd', attw_e.reshape(BT * N, 1, N), edge_vec_3d,
                              preferred_element_type=f32).reshape(BT * N, D)

    # mu_agg_node(cat(node, sum_adj_node, sum_adj_edge))
    agg_in = jnp.concatenate(
        [node_vec_b, sum_adj_node.astype(bf16), sum_adj_edge.astype(bf16)], axis=-1)
    out = _act(jnp.dot(agg_in, wagg_ref[...], preferred_element_type=f32) + b_agg)
    out_ref[...] = out.reshape(BT, N, D).astype(out_ref.dtype)


# ---------------------------------------------------------------------------
# VMEM budgeting / batch-tile selection
# ---------------------------------------------------------------------------

def _ceil_to(x, m):
    return -(-x // m) * m


def _pad2d_bytes(rows, cols, itemsize):
    """VMEM footprint of a 2-D (rows, cols) value under (8, 128) tiling."""
    return _ceil_to(max(rows, 1), 8) * _ceil_to(max(cols, 1), 128) * itemsize


def _per_graph_vmem_bytes(n, n_attr, e_attr, d):
    """Approximate per-graph VMEM working set, lane/sublane padding included."""
    nn = n * n
    b = 0
    # double-buffered input blocks (bf16) and output block (f32)
    b += 2 * _pad2d_bytes(n, n, 2)             # adj
    b += 2 * _pad2d_bytes(n, n_attr, 2)        # node attributes (An lane-pads to 128)
    b += 2 * _pad2d_bytes(nn, e_attr, 2)       # edge attributes (Ae lane-pads to 128)
    b += 2 * _pad2d_bytes(n, d, 4)             # output
    # in-kernel intermediates (approximate concurrent peak)
    b += _pad2d_bytes(nn, d, 4) + _pad2d_bytes(nn, d, 2)    # edge_vec f32 + bf16
    b += _pad2d_bytes(nn, 2 * d, 4)                         # ep_proj
    b += n * _pad2d_bytes(n, d, 4)                          # edge_c
    b += 2 * n * _pad2d_bytes(n, d, 4)                      # att_n, att_e (f32 worst case)
    b += 6 * _pad2d_bytes(n, n, 4)                          # logits / masked weights / scratch
    return b


def _fixed_vmem_bytes(n_attr, e_attr, d):
    """Weight / bias slab blocks (counted double-buffered)."""
    w = (_pad2d_bytes(n_attr, d, 2) + _pad2d_bytes(e_attr, d, 2)
         + 2 * _pad2d_bytes(d, 2 * d, 2) + _pad2d_bytes(3 * d, d, 2)
         + _pad2d_bytes(8, 128, 4))
    return 2 * w


def _vmem_capacity_bytes():
    try:
        return int(pltpu.get_tpu_info().vmem_capacity_bytes)
    except Exception:
        pass
    try:
        kind = jax.devices()[0].device_kind.lower()
    except Exception:
        kind = ""
    if any(tag in kind for tag in ("v4", "v5", "v6")):
        return 128 * 2 ** 20
    return 64 * 2 ** 20           # conservative: v7x physical VMEM per TensorCore


def _mix_dtype_for_device():
    try:
        kind = jax.devices()[0].device_kind.lower()
    except Exception:
        return jnp.float32
    if "v6" in kind or "v7" in kind:
        return jnp.bfloat16        # bf16 EUP/VPU available
    return jnp.float32


def _pick_b_tile(batch, per_graph_bytes, budget_bytes):
    max_bt = max(1, int(budget_bytes) // max(int(per_graph_bytes), 1))
    # keep >= 2 grid steps (>= 4 for bigger batches) for megacore + DMA/compute overlap
    if batch >= 8:
        max_bt = min(max_bt, batch // 4)
    elif batch >= 2:
        max_bt = min(max_bt, batch // 2)
    bt = 1
    for cand in range(1, batch + 1):
        if batch % cand == 0 and cand <= max_bt:
            bt = cand
    return bt


# ---------------------------------------------------------------------------
# Wrapper
# ---------------------------------------------------------------------------

def gatqn_forward(adj, node_attribute, edge_attribute, params, b_tile=None):
    B, N, An = node_attribute.shape
    Ae = edge_attribute.shape[-1]
    D = params["W_node"].shape[0]
    VW = 128 * math.ceil(D / 128)          # bias/vector slab width (lane tile)

    f32, bf16 = jnp.float32, jnp.bfloat16

    vmem_cap = int(0.75 * _vmem_capacity_bytes())    # ~48 MiB on v7x, ~96 MiB on v5e/v6e
    fixed = _fixed_vmem_bytes(An, Ae, D)
    per_graph = _per_graph_vmem_bytes(N, An, Ae, D)
    budget = max(0, int(0.6 * (vmem_cap - fixed)))
    BT = b_tile if b_tile is not None else _pick_b_tile(B, per_graph, budget)
    assert B % BT == 0, (B, BT)

    adj_in = adj.astype(bf16)                         # exact for 0/1 masks
    node_in = node_attribute.astype(bf16)
    edge_in = edge_attribute.reshape(B, N * N, Ae).astype(bf16)

    # weight slabs (transposed so the kernel computes x @ W), cast to bf16 for the MXU
    w_emb_n = params["W_node"].T.astype(bf16)                                   # (An, D)
    w_emb_e = params["W_edge"].T.astype(bf16)                                   # (Ae, D)
    Wan_t = params["W_att_node"].T                                              # (3D, D)
    w_node_proj = jnp.concatenate([Wan_t[:D, :], Wan_t[2 * D:, :]],
                                  axis=1).astype(bf16)                          # (D, 2D): [same | diff]
    w_edge_proj = jnp.concatenate([Wan_t[D:2 * D, :], params["W_att_edge"].T],
                                  axis=1).astype(bf16)                          # (D, 2D): [edge_c | att_edge]
    w_agg = params["W_agg"].T.astype(bf16)                                      # (3D, D)

    def _row(v, width):
        v = v.reshape(1, -1)
        return jnp.pad(v, ((0, 0), (0, width - v.shape[1])))

    vec_slab = jnp.concatenate([
        _row(params["b_node"], VW),
        _row(params["b_edge"], VW),
        _row(params["b_agg"], VW),
        _row(params["W_mlp_node"][0], VW),
        _row(params["W_mlp_edge"][0], VW),
        jnp.zeros((3, VW), f32),
    ], axis=0).astype(f32)                                                      # (8, VW)

    def batched3(shape):
        return pl.BlockSpec((BT,) + tuple(shape[1:]), lambda b: (b, 0, 0))

    def full2(a):
        return pl.BlockSpec(a.shape, lambda b: (0, 0))

    in_specs = [
        batched3(adj_in.shape),
        batched3(node_in.shape),
        batched3(edge_in.shape),
        full2(w_emb_n), full2(w_emb_e), full2(w_node_proj),
        full2(w_edge_proj), full2(w_agg), full2(vec_slab),
    ]
    out_spec = pl.BlockSpec((BT, N, D), lambda b: (b, 0, 0))

    kernel = functools.partial(_gatqn_kernel, mix_dtype=_mix_dtype_for_device())

    out = pl.pallas_call(
        kernel,
        out_shape=jax.ShapeDtypeStruct((B, N, D), f32),
        grid_spec=pltpu.PrefetchScalarGridSpec(
            num_scalar_prefetch=0,
            grid=(B // BT,),
            in_specs=in_specs,
            out_specs=out_spec,
        ),
        compiler_params=pltpu.CompilerParams(
            dimension_semantics=("parallel",),
            vmem_limit_bytes=vmem_cap,
        ),
    )(adj_in, node_in, edge_in,
      w_emb_n, w_emb_e, w_node_proj, w_edge_proj, w_agg, vec_slab)

    return out


# ---------------------------------------------------------------------------
# Pure-JAX reference + init (for verification)
# ---------------------------------------------------------------------------

def gatqn_reference(adj, node_attribute, edge_attribute, p):
    """Pure-JAX (f32) replica of the PyTorch forward, for verification."""
    B, N, _ = node_attribute.shape
    D = p["W_node"].shape[0]
    adj4 = adj[..., None]
    node_vec = _act(node_attribute @ p["W_node"].T + p["b_node"])
    edge_vec = _act(edge_attribute @ p["W_edge"].T + p["b_edge"])
    same = jnp.broadcast_to(node_vec[:, :, None, :], (B, N, N, D))
    diff = jnp.broadcast_to(node_vec[:, None, :, :], (B, N, N, D))
    att_factor = jnp.concatenate([same, edge_vec, diff], axis=-1)
    mu_att_n = _mix_act(att_factor @ p["W_att_node"].T)
    mu_att_n = adj4 * jnp.exp(mu_att_n @ p["W_mlp_node"].T)
    mu_att_n = mu_att_n / jnp.maximum(
        jnp.sum(mu_att_n, axis=-2, keepdims=True), EPS_CNST)
    mu_att_e = _mix_act(edge_vec @ p["W_att_edge"].T)
    mu_att_e = adj4 * jnp.exp(mu_att_e @ p["W_mlp_edge"].T)
    mu_att_e = mu_att_e / jnp.maximum(
        jnp.sum(mu_att_e, axis=-2, keepdims=True), EPS_CNST)
    sum_adj_node = jnp.matmul(jnp.squeeze(mu_att_n, -1), node_vec)
    sum_adj_edge = jnp.sum(mu_att_e * edge_vec, axis=-2)
    node_plus_edge = jnp.concatenate([node_vec, sum_adj_node, sum_adj_edge], axis=-1)
    return _act(node_plus_edge @ p["W_agg"].T + p["b_agg"])


def init_params(key, embed_dim, node_attribute_size, edge_attribute_size):
    """Deterministic torch.nn.Linear-style init: U(-1/sqrt(fan_in), 1/sqrt(fan_in))."""
    D, An, Ae = embed_dim, node_attribute_size, edge_attribute_size
    ks = jax.random.split(key, 12)

    def unif(k, shape, fan_in):
        bound = 1.0 / float(fan_in) ** 0.5
        return jax.random.uniform(k, shape, jnp.float32, -bound, bound)

    return {
        "W_node": unif(ks[0], (D, An), An),
        "b_node": unif(ks[1], (D,), An),
        "W_edge": unif(ks[2], (D, Ae), Ae),
        "b_edge": unif(ks[3], (D,), Ae),
        "W_att_node": unif(ks[4], (D, 3 * D), 3 * D),
        "W_att_edge": unif(ks[5], (D, D), D),
        "W_mlp_node": unif(ks[6], (1, D), D),
        "W_mlp_edge": unif(ks[7], (1, D), D),
        "W_agg": unif(ks[8], (D, 3 * D), 3 * D),
        "b_agg": unif(ks[9], (D,), 3 * D),
        # declared in __init__ but unused in forward():
        "W_final_agg": unif(ks[10], (D, 2 * D), 2 * D),
        "b_final_agg": unif(ks[11], (D,), 2 * D),
    }


if __name__ == "__main__":
    B, N, D, An, Ae = 2, 8, 32, 6, 4
    key = jax.random.PRNGKey(0)
    k_adj, k_node, k_edge, k_par = jax.random.split(key, 4)

    adj = (jax.random.uniform(k_adj, (B, N, N)) > 0.5).astype(jnp.float32)
    node_attribute = jax.random.normal(k_node, (B, N, An), jnp.float32)
    edge_attribute = jax.random.normal(k_edge, (B, N, N, Ae), jnp.float32)
    params = init_params(k_par, D, An, Ae)

    out = jax.block_until_ready(
        gatqn_forward(adj, node_attribute, edge_attribute, params))
    ref = jax.block_until_ready(
        gatqn_reference(adj, node_attribute, edge_attribute, params))

    assert out.shape == (B, N, D), out.shape
    max_err = float(jnp.max(jnp.abs(out - ref)))
    assert bool(jnp.allclose(out, ref, atol=3e-2, rtol=3e-2)), max_err
    print("KERNEL_OK")
</pallas_src>

<mosaic_0001>
module attributes {stable_mosaic.version = 11 : i64} {
  func.func @_gatqn_kernel(%arg0: i32, %arg1: memref<1x8x8xbf16, #tpu.memory_space<vmem>>, %arg2: memref<1x8x6xbf16, #tpu.memory_space<vmem>>, %arg3: memref<1x64x4xbf16, #tpu.memory_space<vmem>>, %arg4: memref<6x32xbf16, #tpu.memory_space<vmem>>, %arg5: memref<4x32xbf16, #tpu.memory_space<vmem>>, %arg6: memref<32x64xbf16, #tpu.memory_space<vmem>>, %arg7: memref<32x64xbf16, #tpu.memory_space<vmem>>, %arg8: memref<96x32xbf16, #tpu.memory_space<vmem>>, %arg9: memref<8x128xf32, #tpu.memory_space<vmem>>, %arg10: memref<1x8x32xf32, #tpu.memory_space<vmem>>) attributes {dimension_semantics = [#tpu.dimension_semantics<parallel>], iteration_bounds = array<i64: 2>, scalar_prefetch = 0 : i64, scratch_operands = 0 : i64, tpu.core_type = #tpu.core_type<tc>, window_params = [{transform_indices = @transform_0, window_bounds = array<i64: 1, 8, 8>}, {transform_indices = @transform_1, window_bounds = array<i64: 1, 8, 6>}, {transform_indices = @transform_2, window_bounds = array<i64: 1, 64, 4>}, {pipeline_mode = #tpu.pipeline_mode<synchronous>, transform_indices = @transform_3, window_bounds = array<i64: 6, 32>}, {pipeline_mode = #tpu.pipeline_mode<synchronous>, transform_indices = @transform_4, window_bounds = array<i64: 4, 32>}, {pipeline_mode = #tpu.pipeline_mode<synchronous>, transform_indices = @transform_5, window_bounds = array<i64: 32, 64>}, {pipeline_mode = #tpu.pipeline_mode<synchronous>, transform_indices = @transform_6, window_bounds = array<i64: 32, 64>}, {pipeline_mode = #tpu.pipeline_mode<synchronous>, transform_indices = @transform_7, window_bounds = array<i64: 96, 32>}, {pipeline_mode = #tpu.pipeline_mode<synchronous>, transform_indices = @transform_8, window_bounds = array<i64: 8, 128>}, {transform_indices = @transform_9, window_bounds = array<i64: 1, 8, 32>}]} {
    %c0 = arith.constant 0 : index
    %c0_0 = arith.constant 0 : index
    %c0_1 = arith.constant 0 : index
    %0 = vector.load %arg1[%c0, %c0_0, %c0_1] : memref<1x8x8xbf16, #tpu.memory_space<vmem>>, vector<1x8x8xbf16>
    %1 = arith.extf %0 : vector<1x8x8xbf16> to vector<1x8x8xf32>
    %c0_2 = arith.constant 0 : index
    %c0_3 = arith.constant 0 : index
    %c0_4 = arith.constant 0 : index
    %2 = vector.load %arg2[%c0_2, %c0_3, %c0_4] : memref<1x8x6xbf16, #tpu.memory_space<vmem>>, vector<1x8x6xbf16>
    %3 = vector.shape_cast %2 : vector<1x8x6xbf16> to vector<8x6xbf16>
    %c0_5 = arith.constant 0 : index
    %c0_6 = arith.constant 0 : index
    %c0_7 = arith.constant 0 : index
    %4 = vector.load %arg3[%c0_5, %c0_6, %c0_7] : memref<1x64x4xbf16, #tpu.memory_space<vmem>>, vector<1x64x4xbf16>
    %5 = vector.shape_cast %4 : vector<1x64x4xbf16> to vector<64x4xbf16>
    %c0_8 = arith.constant 0 : index
    %c0_9 = arith.constant 0 : index
    %6 = vector.load %arg9[%c0_8, %c0_9] : memref<8x128xf32, #tpu.memory_space<vmem>>, vector<1x32xf32>
    %c1 = arith.constant 1 : index
    %c0_10 = arith.constant 0 : index
    %7 = vector.load %arg9[%c1, %c0_10] : memref<8x128xf32, #tpu.memory_space<vmem>>, vector<1x32xf32>
    %c2 = arith.constant 2 : index
    %c0_11 = arith.constant 0 : index
    %8 = vector.load %arg9[%c2, %c0_11] : memref<8x128xf32, #tpu.memory_space<vmem>>, vector<1x32xf32>
    %c3 = arith.constant 3 : index
    %c0_12 = arith.constant 0 : index
    %9 = vector.load %arg9[%c3, %c0_12] : memref<8x128xf32, #tpu.memory_space<vmem>>, vector<1x32xf32>
    %c4 = arith.constant 4 : index
    %c0_13 = arith.constant 0 : index
    %10 = vector.load %arg9[%c4, %c0_13] : memref<8x128xf32, #tpu.memory_space<vmem>>, vector<1x32xf32>
    %c0_14 = arith.constant 0 : index
    %c0_15 = arith.constant 0 : index
    %11 = vector.load %arg4[%c0_14, %c0_15] : memref<6x32xbf16, #tpu.memory_space<vmem>>, vector<6x32xbf16>
    %cst = arith.constant dense<0.000000e+00> : vector<8x32xf32>
    %12 = tpu.matmul %3, %11, %cst {dimension_numbers = #tpu.dot_dimension_numbers<[1], [0], [0], [1], [0, 0, 1, 1], [], []>} : vector<8x6xbf16>, vector<6x32xbf16>, vector<8x32xf32> -> vector<8x32xf32>
    %13 = vector.broadcast %6 : vector<1x32xf32> to vector<8x32xf32>
    %14 = arith.addf %12, %13 : vector<8x32xf32>
    %cst_16 = arith.constant 0.000000e+00 : f32
    %15 = vector.broadcast %cst_16 : f32 to vector<8x32xf32>
    %16 = arith.maximumf %14, %15 : vector<8x32xf32>
    %c0_17 = arith.constant 0 : index
    %c0_18 = arith.constant 0 : index
    %17 = vector.load %arg5[%c0_17, %c0_18] : memref<4x32xbf16, #tpu.memory_space<vmem>>, vector<4x32xbf16>
    %cst_19 = arith.constant dense<0.000000e+00> : vector<64x32xf32>
    %18 = tpu.matmul %5, %17, %cst_19 {dimension_numbers = #tpu.dot_dimension_numbers<[1], [0], [0], [1], [0, 0, 1, 1], [], []>} : vector<64x4xbf16>, vector<4x32xbf16>, vector<64x32xf32> -> vector<64x32xf32>
    %19 = vector.broadcast %7 : vector<1x32xf32> to vector<64x32xf32>
    %20 = arith.addf %18, %19 : vector<64x32xf32>
    %cst_20 = arith.constant 0.000000e+00 : f32
    %21 = vector.broadcast %cst_20 : f32 to vector<64x32xf32>
    %22 = arith.maximumf %20, %21 : vector<64x32xf32>
    %23 = arith.truncf %16 : vector<8x32xf32> to vector<8x32xbf16>
    %24 = arith.truncf %22 : vector<64x32xf32> to vector<64x32xbf16>
    %c0_21 = arith.constant 0 : index
    %c0_22 = arith.constant 0 : index
    %25 = vector.load %arg6[%c0_21, %c0_22] : memref<32x64xbf16, #tpu.memory_space<vmem>>, vector<32x64xbf16>
    %cst_23 = arith.constant dense<0.000000e+00> : vector<8x64xf32>
    %26 = tpu.matmul %23, %25, %cst_23 {dimension_numbers = #tpu.dot_dimension_numbers<[1], [0], [0], [1], [0, 0, 1, 1], [], []>} : vector<8x32xbf16>, vector<32x64xbf16>, vector<8x64xf32> -> vector<8x64xf32>
    %c0_24 = arith.constant 0 : index
    %c0_25 = arith.constant 0 : index
    %27 = vector.load %arg7[%c0_24, %c0_25] : memref<32x64xbf16, #tpu.memory_space<vmem>>, vector<32x64xbf16>
    %cst_26 = arith.constant dense<0.000000e+00> : vector<64x64xf32>
    %28 = tpu.matmul %24, %27, %cst_26 {dimension_numbers = #tpu.dot_dimension_numbers<[1], [0], [0], [1], [0, 0, 1, 1], [], []>} : vector<64x32xbf16>, vector<32x64xbf16>, vector<64x64xf32> -> vector<64x64xf32>
    %29 = vector.extract_strided_slice %26 {offsets = [0, 0], sizes = [8, 32], strides = [1, 1]} : vector<8x64xf32> to vector<8x32xf32>
    %30 = vector.shape_cast %29 : vector<8x32xf32> to vector<1x8x1x32xf32>
    %31 = vector.extract_strided_slice %26 {offsets = [0, 32], sizes = [8, 32], strides = [1, 1]} : vector<8x64xf32> to vector<8x32xf32>
    %32 = vector.shape_cast %31 : vector<8x32xf32> to vector<1x1x8x32xf32>
    %33 = vector.extract_strided_slice %28 {offsets = [0, 0], sizes = [64, 32], strides = [1, 1]} : vector<64x64xf32> to vector<64x32xf32>
    %34 = vector.shape_cast %33 : vector<64x32xf32> to vector<1x8x8x32xf32>
    %35 = vector.broadcast %30 : vector<1x8x1x32xf32> to vector<1x8x8x32xf32>
    %36 = arith.addf %34, %35 : vector<1x8x8x32xf32>
    %37 = vector.broadcast %32 : vector<1x1x8x32xf32> to vector<1x8x8x32xf32>
    %38 = arith.addf %36, %37 : vector<1x8x8x32xf32>
    %39 = math.tanh %38 : vector<1x8x8x32xf32>
    %40 = vector.extract_strided_slice %28 {offsets = [0, 32], sizes = [64, 32], strides = [1, 1]} : vector<64x64xf32> to vector<64x32xf32>
    %41 = vector.shape_cast %40 : vector<64x32xf32> to vector<1x8x8x32xf32>
    %42 = math.tanh %41 : vector<1x8x8x32xf32>
    %43 = vector.shape_cast %9 : vector<1x32xf32> to vector<1x1x1x32xf32>
    %44 = vector.broadcast %43 : vector<1x1x1x32xf32> to vector<1x8x8x32xf32>
    %45 = arith.mulf %39, %44 : vector<1x8x8x32xf32>
    %cst_27 = arith.constant dense<0.000000e+00> : vector<1x8x8xf32>
    %46 = vector.multi_reduction <add>, %45, %cst_27 [3] : vector<1x8x8x32xf32> to vector<1x8x8xf32>
    %47 = vector.shape_cast %10 : vector<1x32xf32> to vector<1x1x1x32xf32>
    %48 = vector.broadcast %47 : vector<1x1x1x32xf32> to vector<1x8x8x32xf32>
    %49 = arith.mulf %42, %48 : vector<1x8x8x32xf32>
    %cst_28 = arith.constant dense<0.000000e+00> : vector<1x8x8xf32>
    %50 = vector.multi_reduction <add>, %49, %cst_28 [3] : vector<1x8x8x32xf32> to vector<1x8x8xf32>
    %51 = math.exp %46 : vector<1x8x8xf32>
    %52 = arith.mulf %1, %51 : vector<1x8x8xf32>
    %cst_29 = arith.constant dense<0.000000e+00> : vector<1x8xf32>
    %53 = vector.multi_reduction <add>, %52, %cst_29 [2] : vector<1x8x8xf32> to vector<1x8xf32>
    %54 = vector.shape_cast %53 : vector<1x8xf32> to vector<1x8x1xf32>
    %cst_30 = arith.constant 9.99999997E-7 : f32
    %55 = vector.broadcast %cst_30 : f32 to vector<1x8x1xf32>
    %56 = arith.maximumf %54, %55 : vector<1x8x1xf32>
    %cst_31 = arith.constant 1.000000e+00 : f32
    %57 = vector.broadcast %cst_31 : f32 to vector<1x8x1xf32>
    %58 = arith.divf %57, %56 : vector<1x8x1xf32>
    %59 = vector.broadcast %58 : vector<1x8x1xf32> to vector<1x8x8xf32>
    %60 = arith.mulf %52, %59 : vector<1x8x8xf32>
    %61 = math.exp %50 : vector<1x8x8xf32>
    %62 = arith.mulf %1, %61 : vector<1x8x8xf32>
    %cst_32 = arith.constant dense<0.000000e+00> : vector<1x8xf32>
    %63 = vector.multi_reduction <add>, %62, %cst_32 [2] : vector<1x8x8xf32> to vector<1x8xf32>
    %64 = vector.shape_cast %63 : vector<1x8xf32> to vector<1x8x1xf32>
    %cst_33 = arith.constant 9.99999997E-7 : f32
    %65 = vector.broadcast %cst_33 : f32 to vector<1x8x1xf32>
    %66 = arith.maximumf %64, %65 : vector<1x8x1xf32>
    %cst_34 = arith.constant 1.000000e+00 : f32
    %67 = vector.broadcast %cst_34 : f32 to vector<1x8x1xf32>
    %68 = arith.divf %67, %66 : vector<1x8x1xf32>
    %69 = vector.broadcast %68 : vector<1x8x1xf32> to vector<1x8x8xf32>
    %70 = arith.mulf %62, %69 : vector<1x8x8xf32>
    %71 = vector.shape_cast %16 : vector<8x32xf32> to vector<1x8x32xf32>
    "tpu.trace_start"() <{level = 10 : i32, message = "bij,bjd->bid"}> : () -> ()
    %cst_35 = arith.constant dense<0.000000e+00> : vector<1x8x32xf32>
    %72 = tpu.matmul %60, %71, %cst_35 {dimension_numbers = #tpu.dot_dimension_numbers<[2], [1], [1], [2], [0, 0, 0, 1, 1, 2], [0], [0]>} : vector<1x8x8xf32>, vector<1x8x32xf32>, vector<1x8x32xf32> -> vector<1x8x32xf32>
    "tpu.trace_stop"() : () -> ()
    %73 = vector.shape_cast %72 : vector<1x8x32xf32> to vector<8x32xf32>
    %74 = vector.shape_cast %22 : vector<64x32xf32> to vector<8x8x32xf32>
    %75 = vector.shape_cast %70 : vector<1x8x8xf32> to vector<8x1x8xf32>
    "tpu.trace_start"() <{level = 10 : i32, message = "xqj,xjd->xqd"}> : () -> ()
    %cst_36 = arith.constant dense<0.000000e+00> : vector<8x1x32xf32>
    %76 = tpu.matmul %75, %74, %cst_36 {dimension_numbers = #tpu.dot_dimension_numbers<[2], [1], [1], [2], [0, 0, 0, 1, 1, 2], [0], [0]>} : vector<8x1x8xf32>, vector<8x8x32xf32>, vector<8x1x32xf32> -> vector<8x1x32xf32>
    "tpu.trace_stop"() : () -> ()
    %77 = vector.shape_cast %76 : vector<8x1x32xf32> to vector<8x32xf32>
    %78 = arith.truncf %73 : vector<8x32xf32> to vector<8x32xbf16>
    %79 = arith.truncf %77 : vector<8x32xf32> to vector<8x32xbf16>
    %80 = tpu.concatenate %23, %78, %79 in 1 : vector<8x32xbf16>, vector<8x32xbf16>, vector<8x32xbf16> -> vector<8x96xbf16>
    %c0_37 = arith.constant 0 : index
    %c0_38 = arith.constant 0 : index
    %81 = vector.load %arg8[%c0_37, %c0_38] : memref<96x32xbf16, #tpu.memory_space<vmem>>, vector<96x32xbf16>
    %cst_39 = arith.constant dense<0.000000e+00> : vector<8x32xf32>
    %82 = tpu.matmul %80, %81, %cst_39 {dimension_numbers = #tpu.dot_dimension_numbers<[1], [0], [0], [1], [0, 0, 1, 1], [], []>} : vector<8x96xbf16>, vector<96x32xbf16>, vector<8x32xf32> -> vector<8x32xf32>
    %83 = vector.broadcast %8 : vector<1x32xf32> to vector<8x32xf32>
    %84 = arith.addf %82, %83 : vector<8x32xf32>
    %cst_40 = arith.constant 0.000000e+00 : f32
    %85 = vector.broadcast %cst_40 : f32 to vector<8x32xf32>
    %86 = arith.maximumf %84, %85 : vector<8x32xf32>
    %87 = vector.shape_cast %86 : vector<8x32xf32> to vector<1x8x32xf32>
    %c0_41 = arith.constant 0 : index
    %c0_42 = arith.constant 0 : index
    %c0_43 = arith.constant 0 : index
    %88 = vector.load %arg10[%c0_41, %c0_42, %c0_43] : memref<1x8x32xf32, #tpu.memory_space<vmem>>, vector<1x8x32xf32>
    tpu.vector_store %arg10[%c0_41, %c0_42, %c0_43], %87 {strides = array<i32>} : memref<1x8x32xf32, #tpu.memory_space<vmem>>, vector<1x8x32xf32>,
    return
  }
  func.func @transform_0(%arg0: i32) -> (i32, i32, i32) {
    %c0_i32 = arith.constant 0 : i32
    %c0_i32_0 = arith.constant 0 : i32
    %c0_i32_1 = arith.constant 0 : i32
    return %arg0, %c0_i32, %c0_i32_0 : i32, i32, i32
  }
  func.func @transform_1(%arg0: i32) -> (i32, i32, i32) {
    %c0_i32 = arith.constant 0 : i32
    %c0_i32_0 = arith.constant 0 : i32
    %c0_i32_1 = arith.constant 0 : i32
    return %arg0, %c0_i32, %c0_i32_0 : i32, i32, i32
  }
  func.func @transform_2(%arg0: i32) -> (i32, i32, i32) {
    %c0_i32 = arith.constant 0 : i32
    %c0_i32_0 = arith.constant 0 : i32
    %c0_i32_1 = arith.constant 0 : i32
    return %arg0, %c0_i32, %c0_i32_0 : i32, i32, i32
  }
  func.func @transform_3(%arg0: i32) -> (i32, i32) {
    %c0_i32 = arith.constant 0 : i32
    %c0_i32_0 = arith.constant 0 : i32
    %c0_i32_1 = arith.constant 0 : i32
    return %c0_i32, %c0_i32_0 : i32, i32
  }
  func.func @transform_4(%arg0: i32) -> (i32, i32) {
    %c0_i32 = arith.constant 0 : i32
    %c0_i32_0 = arith.constant 0 : i32
    %c0_i32_1 = arith.constant 0 : i32
    return %c0_i32, %c0_i32_0 : i32, i32
  }
  func.func @transform_5(%arg0: i32) -> (i32, i32) {
    %c0_i32 = arith.constant 0 : i32
    %c0_i32_0 = arith.constant 0 : i32
    %c0_i32_1 = arith.constant 0 : i32
    return %c0_i32, %c0_i32_0 : i32, i32
  }
  func.func @transform_6(%arg0: i32) -> (i32, i32) {
    %c0_i32 = arith.constant 0 : i32
    %c0_i32_0 = arith.constant 0 : i32
    %c0_i32_1 = arith.constant 0 : i32
    return %c0_i32, %c0_i32_0 : i32, i32
  }
  func.func @transform_7(%arg0: i32) -> (i32, i32) {
    %c0_i32 = arith.constant 0 : i32
    %c0_i32_0 = arith.constant 0 : i32
    %c0_i32_1 = arith.constant 0 : i32
    return %c0_i32, %c0_i32_0 : i32, i32
  }
  func.func @transform_8(%arg0: i32) -> (i32, i32) {
    %c0_i32 = arith.constant 0 : i32
    %c0_i32_0 = arith.constant 0 : i32
    %c0_i32_1 = arith.constant 0 : i32
    return %c0_i32, %c0_i32_0 : i32, i32
  }
  func.func @transform_9(%arg0: i32) -> (i32, i32, i32) {
    %c0_i32 = arith.constant 0 : i32
    %c0_i32_0 = arith.constant 0 : i32
    %c0_i32_1 = arith.constant 0 : i32
    return %arg0, %c0_i32, %c0_i32_0 : i32, i32, i32
  }
}

</mosaic_0001>

<llo_original>
// kernel: tpu_custom_call.1
$region0: #{tpu_custom_call.1}
  #allocation0 [shape = 'u32[]', space=smem, size = 0x4, offset = 0x4, fixed_abs, tag = 'smem constant byte address 0x4 - core index']
  #allocation1 [shape = 'u32[144,128]{1,0:T(1,128)}', space=vmem, size = 0x12000, scoped, tag = 'internal scratch']
  %s0 = inlined_call_operand.vmem [shape: bf16[2,8,8], index: 0, kind: input, shape index: {}]
  %s1 = inlined_call_operand.vmem [shape: bf16[2,8,6], index: 1, kind: input, shape index: {}]
  %s2 = inlined_call_operand.vmem [shape: bf16[2,64,4], index: 2, kind: input, shape index: {}]
  %s3 = inlined_call_operand.vmem [shape: bf16[6,32], index: 3, kind: input, shape index: {}]
  %s4 = inlined_call_operand.vmem [shape: bf16[4,32], index: 4, kind: input, shape index: {}]
  %s5 = inlined_call_operand.vmem [shape: bf16[32,64], index: 5, kind: input, shape index: {}]
  %s6 = inlined_call_operand.vmem [shape: bf16[32,64], index: 6, kind: input, shape index: {}]
  %s7 = inlined_call_operand.vmem [shape: bf16[96,32], index: 7, kind: input, shape index: {}]
  %s8 = inlined_call_operand.vmem [shape: f32[8,128], index: 8, kind: input, shape index: {}]
  %s9 = inlined_call_operand.hbm [shape: f32[2,8,32], index: 9, kind: output, shape index: {}]
  %s10 = sld [smem:[#allocation0]]
  $region69: #{tpu_custom_call.1} parent=0
    _
  %s12 = ssub.s32 1, %s10
  %s13 = scalar_select 0, %s12, %s10
  $region1: #{tpu_custom_call.1} parent=0
    #allocation2 [shape = 'u8[8192]{0}', space=vmem, size = 0x2000, scoped, tag = 'output window, operand 0']
    #allocation3 [shape = 's32[2]{0}', space=sflag, size = 0x8, scoped, tag = 'scoped memory for tpu_custom_call.1']
    %14 = vsyncpa [#allocation3], 0
    %s15 = scalar_lea.sflag [#allocation3], 1
    %16 = vsyncpa %s15, 0
    loop: start=0, step=1, limit=4
    $region2: #{tpu_custom_call.1} parent=1 // loop_pre_header
      _
    $region3: #{tpu_custom_call.1} parent=1 // loop_header
      %s18 = sphi 0, %s22
      %p19 = scmp.ge.s32.totalorder %s18, 4
      %s28 = sphi 0, %s30
      %s31 = sphi 0, %s28
      %s32 = sphi 0, %s31
      %s48 = sphi 0, %s32
      %s54 = sphi 0, %s56
      %s57 = sphi 0, %s54
      %s58 = sphi 0, %s57
      %s74 = sphi 0, %s58
      %s80 = sphi 0, %s82
      %s83 = sphi 0, %s80
      %s84 = sphi 0, %s83
      %s100 = sphi 0, %s84
      %s104 = sphi 0, %s104
      %s106 = sphi 0, %s104
      %s107 = sphi 0, %s106
      %s121 = sphi 0, %s107
      %s125 = sphi 0, %s125
      %s127 = sphi 0, %s125
      %s128 = sphi 0, %s127
      %s142 = sphi 0, %s128
      %s146 = sphi 0, %s146
      %s148 = sphi 0, %s146
      %s149 = sphi 0, %s148
      %s163 = sphi 0, %s149
      %s167 = sphi 0, %s167
      %s169 = sphi 0, %s167
      %s170 = sphi 0, %s169
      %s184 = sphi 0, %s170
      %s188 = sphi 0, %s188
      %s190 = sphi 0, %s188
      %s191 = sphi 0, %s190
      %s205 = sphi 0, %s191
      %s209 = sphi 0, %s209
      %s211 = sphi 0, %s209
      %s212 = sphi 0, %s211
      %s226 = sphi 0, %s212
      %s232 = sphi 0, %s234
      %s235 = sphi 0, %s232
      %s236 = sphi 0, %s235
      %s252 = sphi 0, %s236
    $region4: #{tpu_custom_call.1} parent=1 // loop_header_branch
      %21 = sbr.rel (%p19) target = $region8
    $region5: #{tpu_custom_call.1} parent=1 // loop_body
      %s23 = ssub.s32 %s18, 1
      %s24 = ssub.s32 %s18, 2
      %s25 = sadd.s32 %s18, 1
      %s26 = ssub.s32 %s18, %s25
      %p27 = scmp.eq.s32.totalorder %s26, 0
      %s29 = sadd.s32 %s28, 1
      %s30 = scalar_select %p27, %s28, %s29
      %p33 = pneg %p27
      %p34 = scmp.eq.s32.totalorder %s18, 1
      %p35 = por %p33, %p34
      %p36 = scmp.ne.s32.totalorder %s28, %s31
      %p37 = scmp.eq.s32.totalorder %s18, 0
      %p38 = por %p36, %p37
      %p39 = scmp.ne.s32.totalorder %s28, %s31
      %p40 = scmp.eq.s32.totalorder %s23, 1
      %p41 = por %p39, %p40
      %p42 = scmp.ne.s32.totalorder %s31, %s32
      %p43 = scmp.eq.s32.totalorder %s23, 0
      %p44 = por %p42, %p43
      %p45 = scmp.ne.s32.totalorder %s31, %s32
      %p46 = scmp.eq.s32.totalorder %s24, 1
      %p47 = por %p45, %p46
      %p49 = scmp.ne.s32.totalorder %s32, %s48
      %p50 = scmp.eq.s32.totalorder %s24, 0
      %p51 = por %p49, %p50
      %s52 = ssub.s32 %s18, %s25
      %p53 = scmp.eq.s32.totalorder %s52, 0
      %s55 = sadd.s32 %s54, 1
      %s56 = scalar_select %p53, %s54, %s55
      %p59 = pneg %p53
      %p60 = scmp.eq.s32.totalorder %s18, 1
      %p61 = por %p59, %p60
      %p62 = scmp.ne.s32.totalorder %s54, %s57
      %p63 = scmp.eq.s32.totalorder %s18, 0
      %p64 = por %p62, %p63
      %p65 = scmp.ne.s32.totalorder %s54, %s57
      %p66 = scmp.eq.s32.totalorder %s23, 1
      %p67 = por %p65, %p66
      %p68 = scmp.ne.s32.totalorder %s57, %s58
      %p69 = scmp.eq.s32.totalorder %s23, 0
      %p70 = por %p68, %p69
      %p71 = scmp.ne.s32.totalorder %s57, %s58
      %p72 = scmp.eq.s32.totalorder %s24, 1
      %p73 = por %p71, %p72
      %p75 = scmp.ne.s32.totalorder %s58, %s74
      %p76 = scmp.eq.s32.totalorder %s24, 0
      %p77 = por %p75, %p76
      %s78 = ssub.s32 %s18, %s25
      %p79 = scmp.eq.s32.totalorder %s78, 0
      %s81 = sadd.s32 %s80, 1
      %s82 = scalar_select %p79, %s80, %s81
      %p85 = pneg %p79
      %p86 = scmp.eq.s32.totalorder %s18, 1
      %p87 = por %p85, %p86
      %p88 = scmp.ne.s32.totalorder %s80, %s83
      %p89 = scmp.eq.s32.totalorder %s18, 0
      %p90 = por %p88, %p89
      %p91 = scmp.ne.s32.totalorder %s80, %s83
      %p92 = scmp.eq.s32.totalorder %s23, 1
      %p93 = por %p91, %p92
      %p94 = scmp.ne.s32.totalorder %s83, %s84
      %p95 = scmp.eq.s32.totalorder %s23, 0
      %p96 = por %p94, %p95
      %p97 = scmp.ne.s32.totalorder %s83, %s84
      %p98 = scmp.eq.s32.totalorder %s24, 1
      %p99 = por %p97, %p98
      %p101 = scmp.ne.s32.totalorder %s84, %s100
      %p102 = scmp.eq.s32.totalorder %s24, 0
      %p103 = por %p101, %p102
      %s105 = sadd.s32 %s104, 1
      %p108 = scmp.eq.s32.totalorder %s18, 1
      %p109 = scmp.ne.s32.totalorder %s104, %s106
      %p110 = scmp.eq.s32.totalorder %s18, 0
      %p111 = por %p109, %p110
      %p112 = scmp.ne.s32.totalorder %s104, %s106
      %p113 = scmp.eq.s32.totalorder %s23, 1
      %p114 = por %p112, %p113
      %p115 = scmp.ne.s32.totalorder %s106, %s107
      %p116 = scmp.eq.s32.totalorder %s23, 0
      %p117 = por %p115, %p116
      %p118 = scmp.ne.s32.totalorder %s106, %s107
      %p119 = scmp.eq.s32.totalorder %s24, 1
      %p120 = por %p118, %p119
      %p122 = scmp.ne.s32.totalorder %s107, %s121
      %p123 = scmp.eq.s32.totalorder %s24, 0
      %p124 = por %p122, %p123
      %s126 = sadd.s32 %s125, 1
      %p129 = scmp.eq.s32.totalorder %s18, 1
      %p130 = scmp.ne.s32.totalorder %s125, %s127
      %p131 = scmp.eq.s32.totalorder %s18, 0
      %p132 = por %p130, %p131
      %p133 = scmp.ne.s32.totalorder %s125, %s127
      %p134 = scmp.eq.s32.totalorder %s23, 1
      %p135 = por %p133, %p134
      %p136 = scmp.ne.s32.totalorder %s127, %s128
      %p137 = scmp.eq.s32.totalorder %s23, 0
      %p138 = por %p136, %p137
      %p139 = scmp.ne.s32.totalorder %s127, %s128
      %p140 = scmp.eq.s32.totalorder %s24, 1
      %p141 = por %p139, %p140
      %p143 = scmp.ne.s32.totalorder %s128, %s142
      %p144 = scmp.eq.s32.totalorder %s24, 0
      %p145 = por %p143, %p144
      %s147 = sadd.s32 %s146, 1
      %p150 = scmp.eq.s32.totalorder %s18, 1
      %p151 = scmp.ne.s32.totalorder %s146, %s148
      %p152 = scmp.eq.s32.totalorder %s18, 0
      %p153 = por %p151, %p152
      %p154 = scmp.ne.s32.totalorder %s146, %s148
      %p155 = scmp.eq.s32.totalorder %s23, 1
      %p156 = por %p154, %p155
      %p157 = scmp.ne.s32.totalorder %s148, %s149
      %p158 = scmp.eq.s32.totalorder %s23, 0
      %p159 = por %p157, %p158
      %p160 = scmp.ne.s32.totalorder %s148, %s149
      %p161 = scmp.eq.s32.totalorder %s24, 1
      %p162 = por %p160, %p161
      %p164 = scmp.ne.s32.totalorder %s149, %s163
      %p165 = scmp.eq.s32.totalorder %s24, 0
      %p166 = por %p164, %p165
      %s168 = sadd.s32 %s167, 1
      %p171 = scmp.eq.s32.totalorder %s18, 1
      %p172 = scmp.ne.s32.totalorder %s167, %s169
      %p173 = scmp.eq.s32.totalorder %s18, 0
      %p174 = por %p172, %p173
      %p175 = scmp.ne.s32.totalorder %s167, %s169
      %p176 = scmp.eq.s32.totalorder %s23, 1
      %p177 = por %p175, %p176
      %p178 = scmp.ne.s32.totalorder %s169, %s170
      %p179 = scmp.eq.s32.totalorder %s23, 0
      %p180 = por %p178, %p179
      %p181 = scmp.ne.s32.totalorder %s169, %s170
      %p182 = scmp.eq.s32.totalorder %s24, 1
      %p183 = por %p181, %p182
      %p185 = scmp.ne.s32.totalorder %s170, %s184
      %p186 = scmp.eq.s32.totalorder %s24, 0
      %p187 = por %p185, %p186
      %s189 = sadd.s32 %s188, 1
      %p192 = scmp.eq.s32.totalorder %s18, 1
      %p193 = scmp.ne.s32.totalorder %s188, %s190
      %p194 = scmp.eq.s32.totalorder %s18, 0
      %p195 = por %p193, %p194
      %p196 = scmp.ne.s32.totalorder %s188, %s190
      %p197 = scmp.eq.s32.totalorder %s23, 1
      %p198 = por %p196, %p197
      %p199 = scmp.ne.s32.totalorder %s190, %s191
      %p200 = scmp.eq.s32.totalorder %s23, 0
      %p201 = por %p199, %p200
      %p202 = scmp.ne.s32.totalorder %s190, %s191
      %p203 = scmp.eq.s32.totalorder %s24, 1
      %p204 = por %p202, %p203
      %p206 = scmp.ne.s32.totalorder %s191, %s205
      %p207 = scmp.eq.s32.totalorder %s24, 0
      %p208 = por %p206, %p207
      %s210 = sadd.s32 %s209, 1
      %p213 = scmp.eq.s32.totalorder %s18, 1
      %p214 = scmp.ne.s32.totalorder %s209, %s211
      %p215 = scmp.eq.s32.totalorder %s18, 0
      %p216 = por %p214, %p215
      %p217 = scmp.ne.s32.totalorder %s209, %s211
      %p218 = scmp.eq.s32.totalorder %s23, 1
      %p219 = por %p217, %p218
      %p220 = scmp.ne.s32.totalorder %s211, %s212
      %p221 = scmp.eq.s32.totalorder %s23, 0
      %p222 = por %p220, %p221
      %p223 = scmp.ne.s32.totalorder %s211, %s212
      %p224 = scmp.eq.s32.totalorder %s24, 1
      %p225 = por %p223, %p224
      %p227 = scmp.ne.s32.totalorder %s212, %s226
      %p228 = scmp.eq.s32.totalorder %s24, 0
      %p229 = por %p227, %p228
      %s230 = ssub.s32 %s18, %s25
      %p231 = scmp.eq.s32.totalorder %s230, 0
      %s233 = sadd.s32 %s232, 1
      %s234 = scalar_select %p231, %s232, %s233
      %p237 = pneg %p231
      %p238 = scmp.eq.s32.totalorder %s18, 1
      %p239 = por %p237, %p238
      %p240 = scmp.ne.s32.totalorder %s232, %s235
      %p241 = scmp.eq.s32.totalorder %s18, 0
      %p242 = por %p240, %p241
      %p243 = scmp.ne.s32.totalorder %s232, %s235
      %p244 = scmp.eq.s32.totalorder %s23, 1
      %p245 = por %p243, %p244
      %p246 = scmp.ne.s32.totalorder %s235, %s236
      %p247 = scmp.eq.s32.totalorder %s23, 0
      %p248 = por %p246, %p247
      %p249 = scmp.ne.s32.totalorder %s235, %s236
      %p250 = scmp.eq.s32.totalorder %s24, 1
      %p251 = por %p249, %p250
      %p253 = scmp.ne.s32.totalorder %s236, %s252
      %p254 = scmp.eq.s32.totalorder %s24, 0
      %p255 = por %p253, %p254
      %p256 = scmp.le.s32.totalorder 1, %s18
      %p257 = scmp.lt.s32.totalorder %s18, 3
      %p258 = pnand %p256, %p257
      %p259 = pneg %p258
      // Predicated region
      $region9: #{tpu_custom_call.1} parent=5 // pred_check
        _
      $region10: #{tpu_custom_call.1} parent=5 // pred_check_branch
        %261 = sbr.rel (%p258) target = $region12
      $region11: #{tpu_custom_call.1} parent=5 // pred_region
        %s262 = ssub.s32 %s18, 1
        // Predicated region
        $region13: #{tpu_custom_call.1} parent=11 // pred_check
          %p263 = pneg %p117
        $region14: #{tpu_custom_call.1} parent=11 // pred_check_branch
          %265 = sbr.rel (%p263) target = $region16
        $region15: #{tpu_custom_call.1} parent=11 // pred_region
          _
        $region16: #{tpu_custom_call.1} parent=11 // pred_fallthru
          _
        // Predicated region
        $region17: #{tpu_custom_call.1} parent=11 // pred_check
          %p266 = pneg %p138
        $region18: #{tpu_custom_call.1} parent=11 // pred_check_branch
          %268 = sbr.rel (%p266) target = $region20
        $region19: #{tpu_custom_call.1} parent=11 // pred_region
          _
        $region20: #{tpu_custom_call.1} parent=11 // pred_fallthru
          _
        // Predicated region
        $region21: #{tpu_custom_call.1} parent=11 // pred_check
          %p269 = pneg %p159
        $region22: #{tpu_custom_call.1} parent=11 // pred_check_branch
          %271 = sbr.rel (%p269) target = $region24
        $region23: #{tpu_custom_call.1} parent=11 // pred_region
          _
        $region24: #{tpu_custom_call.1} parent=11 // pred_fallthru
          _
        // Predicated region
        $region25: #{tpu_custom_call.1} parent=11 // pred_check
          %p272 = pneg %p180
        $region26: #{tpu_custom_call.1} parent=11 // pred_check_branch
          %274 = sbr.rel (%p272) target = $region28
        $region27: #{tpu_custom_call.1} parent=11 // pred_region
          _
        $region28: #{tpu_custom_call.1} parent=11 // pred_fallthru
          _
        // Predicated region
        $region29: #{tpu_custom_call.1} parent=11 // pred_check
          %p275 = pneg %p201
        $region30: #{tpu_custom_call.1} parent=11 // pred_check_branch
          %277 = sbr.rel (%p275) target = $region32
        $region31: #{tpu_custom_call.1} parent=11 // pred_region
          _
        $region32: #{tpu_custom_call.1} parent=11 // pred_fallthru
          _
        // Predicated region
        $region33: #{tpu_custom_call.1} parent=11 // pred_check
          %p278 = pneg %p222
        $region34: #{tpu_custom_call.1} parent=11 // pred_check_branch
          %280 = sbr.rel (%p278) target = $region36
        $region35: #{tpu_custom_call.1} parent=11 // pred_region
          _
        $region36: #{tpu_custom_call.1} parent=11 // pred_fallthru
          _
      $region12: #{tpu_custom_call.1} parent=5 // pred_fallthru
        _
      %p281 = scmp.lt.s32.totalorder %s18, 2
      // Predicated region
      $region37: #{tpu_custom_call.1} parent=5 // pred_check
        %p282 = pneg %p281
      $region38: #{tpu_custom_call.1} parent=5 // pred_check_branch
        %284 = sbr.rel (%p282) target = $region40
      $region39: #{tpu_custom_call.1} parent=5 // pred_region
        // Predicated region
        $region41: #{tpu_custom_call.1} parent=39 // pred_check
          %p285 = pneg %p38
        $region42: #{tpu_custom_call.1} parent=39 // pred_check_branch
          %287 = sbr.rel (%p285) target = $region44
        $region43: #{tpu_custom_call.1} parent=39 // pred_region
          %p288 = scmp.lt.s32.totalorder %s18, 1
          %s289 = scalar_select %p288, %s18, 1
          %s290 = smul.addr %s289, 4
          %s291 = scalar_lea.vmem %s0, %s290
        $region44: #{tpu_custom_call.1} parent=39 // pred_fallthru
          _
        // Predicated region
        $region45: #{tpu_custom_call.1} parent=39 // pred_check
          %p292 = pneg %p64
        $region46: #{tpu_custom_call.1} parent=39 // pred_check_branch
          %294 = sbr.rel (%p292) target = $region48
        $region47: #{tpu_custom_call.1} parent=39 // pred_region
          %p295 = scmp.lt.s32.totalorder %s18, 1
          %s296 = scalar_select %p295, %s18, 1
          %s297 = smul.addr %s296, 4
          %s298 = scalar_lea.vmem %s1, %s297
        $region48: #{tpu_custom_call.1} parent=39 // pred_fallthru
          _
        // Predicated region
        $region49: #{tpu_custom_call.1} parent=39 // pred_check
          %p299 = pneg %p90
        $region50: #{tpu_custom_call.1} parent=39 // pred_check_branch
          %301 = sbr.rel (%p299) target = $region52
        $region51: #{tpu_custom_call.1} parent=39 // pred_region
          %p302 = scmp.lt.s32.totalorder %s18, 1
          %s303 = scalar_select %p302, %s18, 1
          %s304 = smul.addr %s303, 8
          %s305 = smul.addr %s304, 4
          %s306 = scalar_lea.vmem %s2, %s305
        $region52: #{tpu_custom_call.1} parent=39 // pred_fallthru
          _
      $region40: #{tpu_custom_call.1} parent=5 // pred_fallthru
        _
      %p307 = scmp.le.s32.totalorder 1, %s18
      %p308 = scmp.lt.s32.totalorder %s18, 3
      %p309 = pnand %p307, %p308
      %p310 = pneg %p309
      // Predicated region
      $region53: #{tpu_custom_call.1} parent=5 // pred_check
        _
      $region54: #{tpu_custom_call.1} parent=5 // pred_check_branch
        %312 = sbr.rel (%p309) target = $region56
      $region55: #{tpu_custom_call.1} parent=5 // pred_region
        %s313 = ssub.s32 %s18, 1
        %p314 = scmp.lt.s32.totalorder %s23, 1
        %s315 = scalar_select %p314, %s23, 1
        %s316 = smul.addr %s315, 4
        %s317 = scalar_lea.vmem %s0, %s316
        %p318 = pneg %p44
        %p319 = pneg %p41
        %p320 = scmp.lt.s32.totalorder %s23, 1
        %s321 = scalar_select %p320, %s23, 1
        %s322 = smul.addr %s321, 4
        %s323 = scalar_lea.vmem %s1, %s322
        %p324 = pneg %p70
        %p325 = pneg %p67
        %p326 = scmp.lt.s32.totalorder %s23, 1
        %s327 = scalar_select %p326, %s23, 1
        %s328 = smul.addr %s327, 8
        %s329 = smul.addr %s328, 4
        %s330 = scalar_lea.vmem %s2, %s329
        %p331 = pneg %p96
        %p332 = pneg %p93
        %p333 = pneg %p117
        %p334 = pneg %p114
        %p335 = pneg %p138
        %p336 = pneg %p135
        %p337 = pneg %p159
        %p338 = pneg %p156
        %p339 = pneg %p180
        %p340 = pneg %p177
        %p341 = pneg %p201
        %p342 = pneg %p198
        %p343 = pneg %p222
        %p344 = pneg %p219
        %p345 = pneg %p248
        %p346 = pneg %p245
        %s347 = sand.u32 %s235, 1
        %s348 = scalar_lea.sflag [#allocation3], %s347
        %s349 = sand.u32 %s235, 1
        %s350 = smul.addr %s349, 8
        %s351 = scalar_lea.vmem [#allocation2], %s350
        %p352 = scmp.lt.s32.totalorder %s23, 1
        %s353 = scalar_select %p352, %s23, 1
        %s354 = smul.addr %s353, 4
        %s355 = scalar_lea.vmem %s0, %s354
        %p356 = scmp.lt.s32.totalorder %s23, 1
        %s357 = scalar_select %p356, %s23, 1
        %s358 = smul.addr %s357, 4
        %s359 = scalar_lea.vmem %s1, %s358
        %p360 = scmp.lt.s32.totalorder %s23, 1
        %s361 = scalar_select %p360, %s23, 1
        %s362 = smul.addr %s361, 8
        %s363 = smul.addr %s362, 4
        %s364 = scalar_lea.vmem %s2, %s363
        %v366 = vld [vmem:[%s355] sm:$0xf]
        %v367 = vunpack.c.l.bf16 %v366
        %v368 = vld [vmem:[%s359] sm:$0xf]
        %v369 = vld [vmem:[%s364] sm:$0xf]
        %v370 = vld [vmem:[%s364 + $0x4] sm:$0xf]
        %v371 = vld [vmem:[%s364 + $0x8] sm:$0xf]
        %v372 = vld [vmem:[%s364 + $0xc] sm:$0xf]
        %v373 = vld [vmem:[%s364 + $0x10] sm:$0xf]
        %v374 = vld [vmem:[%s364 + $0x14] sm:$0xf]
        %v375 = vld [vmem:[%s364 + $0x18] sm:$0xf]
        %v376 = vld [vmem:[%s364 + $0x1c] sm:$0xf]
        %v377 = vld [vmem:[%s8] sm:$0x1]
        %v378 = vld [vmem:[%s8 + $0x1] sm:$0x1]
        %v379 = vld [vmem:[%s8 + $0x2] sm:$0x1]
        %v380 = vld [vmem:[%s8 + $0x3] sm:$0x1]
        %v381 = vld [vmem:[%s8 + $0x4] sm:$0x1]
        %v382 = vld [vmem:[%s3] sm:$0x7]
        %v383 = vlaneseq
        %v384 = vshrl.u32 %v383, 7
        %v385 = vsub.s32 0, %v384
        %v386 = vrot.slane %v377, %v385
        %vm387 = vcmask 48128
        %v389 = vsel %vm387, %v368, 0
        %vm391 = vcmask 1042432
        %v393 = vsel %vm391, %v382, 0
        %395 = vmatprep.subr.bf16.mxu0 0
        %396 = vmatpush1.bf16.msra.mxu0 %v393
        %397 = vmatprep.subr.bf16.mxu0 0
        %398 = vmatpush1.bf16.msra.mxu0 0
        %399 = vmatprep.subr.bf16.mxu0 0
        %400 = vmatpush1.bf16.msra.mxu0 0
        %401 = vmatprep.subr.bf16.mxu0 0
        %402 = vmatpush1.bf16.msra.mxu0 0
        %403 = vmatprep.subr.bf16.mxu0 0
        %404 = vmatpush1.bf16.msra.mxu0 0
        %405 = vmatprep.subr.bf16.mxu0 0
        %406 = vmatpush1.bf16.msra.mxu0 0
        %407 = vmatprep.subr.bf16.mxu0 0
        %408 = vmatpush1.bf16.msra.mxu0 0
        %409 = vmatprep.subr.bf16.mxu0 0
        %410 = vmatpush1.bf16.msra.mxu0 0
        %411 = vmatprep.subr.bf16.mxu0 0
        %412 = vmatpush1.bf16.msra.mxu0 0
        %413 = vmatprep.subr.bf16.mxu0 0
        %414 = vmatpush1.bf16.msra.mxu0 0
        %415 = vmatprep.subr.bf16.mxu0 0
        %416 = vmatpush1.bf16.msra.mxu0 0
        %417 = vmatprep.subr.bf16.mxu0 0
        %418 = vmatpush1.bf16.msra.mxu0 0
        %419 = vmatprep.subr.bf16.mxu0 0
        %420 = vmatpush1.bf16.msra.mxu0 0
        %421 = vmatprep.subr.bf16.mxu0 0
        %422 = vmatpush1.bf16.msra.mxu0 0
        %423 = vmatprep.subr.bf16.mxu0 0
        %424 = vmatpush1.bf16.msra.mxu0 0
        %425 = vmatprep.subr.bf16.mxu0 0
        %426 = vmatpush1.bf16.msra.mxu0 0
        %427 = vmatprep.mubr.bf16.mxu0 0
        %428 = vmatmul.mubr.bf16.gmra.mrb[0].mxu0 %v389
        %v429 = vpop.f32.mrb[0].mxu0
        %v430 = vadd.f32 %v386, %v429
        %v431 = vpop.f32.mrb[0].mxu0
        %v432 = vpop.f32.mrb[0].mxu0
        %v433 = vpop.f32.mrb[0].mxu0
        %434 = vdwg.mxu0
        %v435 = vmax.f32 %v430, 0.0
        %v436 = vld [vmem:[%s4] sm:$0x3]
        %v437 = vlaneseq
        %v438 = vshrl.u32 %v437, 7
        %v439 = vsub.s32 0, %v438
        %v440 = vrot.slane %v378, %v439
        %v449 = vunpack.c.l.b16 %v369
        %v450 = vunpack.c.l.b16 %v370
        %v451 = vunpack.c.l.b16 %v371
        %v452 = vunpack.c.l.b16 %v372
        %v453 = vunpack.c.l.b16 %v373
        %v454 = vunpack.c.l.b16 %v374
        %v455 = vunpack.c.l.b16 %v375
        %v456 = vunpack.c.l.b16 %v376
        %v457 = vpack.c.b16 %v450, %v449
        %v458 = vpack.c.b16 %v452, %v451
        %v459 = vpack.c.b16 %v454, %v453
        %v460 = vpack.c.b16 %v456, %v455
        %vm461 = vcmask 31744
        %v463 = vsel %vm461, %v457, 0
        %v466 = vsel %vm461, %v458, 0
        %v469 = vsel %vm461, %v459, 0
        %v472 = vsel %vm461, %v460, 0
        %vm474 = vcmask 1041408
        %v476 = vsel %vm474, %v436, 0
        %478 = vmatprep.subr.bf16.mxu0 0
        %479 = vmatpush1.bf16.msra.mxu0 %v476
        %480 = vmatprep.subr.bf16.mxu0 0
        %481 = vmatpush1.bf16.msra.mxu0 0
        %482 = vmatprep.subr.bf16.mxu0 0
        %483 = vmatpush1.bf16.msra.mxu0 0
        %484 = vmatprep.subr.bf16.mxu0 0
        %485 = vmatpush1.bf16.msra.mxu0 0
        %486 = vmatprep.subr.bf16.mxu0 0
        %487 = vmatpush1.bf16.msra.mxu0 0
        %488 = vmatprep.subr.bf16.mxu0 0
        %489 = vmatpush1.bf16.msra.mxu0 0
        %490 = vmatprep.subr.bf16.mxu0 0
        %491 = vmatpush1.bf16.msra.mxu0 0
        %492 = vmatprep.subr.bf16.mxu0 0
        %493 = vmatpush1.bf16.msra.mxu0 0
        %494 = vmatprep.subr.bf16.mxu0 0
        %495 = vmatpush1.bf16.msra.mxu0 0
        %496 = vmatprep.subr.bf16.mxu0 0
        %497 = vmatpush1.bf16.msra.mxu0 0
        %498 = vmatprep.subr.bf16.mxu0 0
        %499 = vmatpush1.bf16.msra.mxu0 0
        %500 = vmatprep.subr.bf16.mxu0 0
        %501 = vmatpush1.bf16.msra.mxu0 0
        %502 = vmatprep.subr.bf16.mxu0 0
        %503 = vmatpush1.bf16.msra.mxu0 0
        %504 = vmatprep.subr.bf16.mxu0 0
        %505 = vmatpush1.bf16.msra.mxu0 0
        %506 = vmatprep.subr.bf16.mxu0 0
        %507 = vmatpush1.bf16.msra.mxu0 0
        %508 = vmatprep.subr.bf16.mxu0 0
        %509 = vmatpush1.bf16.msra.mxu0 0
        %510 = vmatprep.mubr.bf16.mxu0 0
        %511 = vmatmul.mubr.bf16.gmra.mrb[0].mxu0 %v463
        %v512 = vpop.f32.mrb[0].mxu0
        %v513 = vadd.f32 %v440, %v512
        %v514 = vpop.f32.mrb[0].mxu0
        %v515 = vpop.f32.mrb[0].mxu0
        %v516 = vadd.f32 %v440, %v515
        %v517 = vpop.f32.mrb[0].mxu0
        %518 = vmatprep.mubr.bf16.mxu0 0
        %519 = vmatmul.mubr.bf16.gmra.mrb[0].mxu0 %v466
        %v520 = vpop.f32.mrb[0].mxu0
        %v521 = vadd.f32 %v440, %v520
        %v522 = vpop.f32.mrb[0].mxu0
        %v523 = vpop.f32.mrb[0].mxu0
        %v524 = vadd.f32 %v440, %v523
        %v525 = vpop.f32.mrb[0].mxu0
        %526 = vmatprep.mubr.bf16.mxu0 0
        %527 = vmatmul.mubr.bf16.gmra.mrb[0].mxu0 %v469
        %v528 = vpop.f32.mrb[0].mxu0
        %v529 = vadd.f32 %v440, %v528
        %v530 = vpop.f32.mrb[0].mxu0
        %v531 = vpop.f32.mrb[0].mxu0
        %v532 = vadd.f32 %v440, %v531
        %v533 = vpop.f32.mrb[0].mxu0
        %534 = vmatprep.mubr.bf16.mxu0 0
        %535 = vmatmul.mubr.bf16.gmra.mrb[0].mxu0 %v472
        %v536 = vpop.f32.mrb[0].mxu0
        %v537 = vadd.f32 %v440, %v536
        %v538 = vpop.f32.mrb[0].mxu0
        %v539 = vpop.f32.mrb[0].mxu0
        %v540 = vadd.f32 %v440, %v539
        %v541 = vpop.f32.mrb[0].mxu0
        %542 = vdwg.mxu0
        %v543 = vmax.f32 %v513, 0.0
        %v544 = vmax.f32 %v516, 0.0
        %v545 = vmax.f32 %v521, 0.0
        %v546 = vmax.f32 %v524, 0.0
        %v547 = vmax.f32 %v529, 0.0
        %v548 = vmax.f32 %v532, 0.0
        %v549 = vmax.f32 %v537, 0.0
        %v550 = vmax.f32 %v540, 0.0
        %v551 = vpack.c.bf16 %v435, %v435
        %v552 = vpack.c.bf16 %v544, %v543
        %v553 = vpack.c.bf16 %v546, %v545
        %v554 = vpack.c.bf16 %v548, %v547
        %v555 = vpack.c.bf16 %v550, %v549
        %v556 = vld [vmem:[%s5] sm:$0xf]
        %v557 = vld [vmem:[%s5 + $0x4] sm:$0xf]
        %v558 = vld [vmem:[%s5 + $0x8] sm:$0xf]
        %v559 = vld [vmem:[%s5 + $0xc] sm:$0xf]
        %v564 = vunpack.c.l.b16 %v556
        %v565 = vunpack.c.l.b16 %v557
        %v566 = vunpack.c.l.b16 %v558
        %v567 = vunpack.c.l.b16 %v559
        %v568 = vpack.c.b16 %v565, %v564
        %v569 = vpack.c.b16 %v567, %v566
        %vm572 = vcmask 261120
        %v574 = vsel %vm572, %v551, 0
        %576 = vmatprep.subr.bf16.mxu0 0
        %577 = vmatpush1.bf16.msra.mxu0 %v568
        %578 = vmatprep.subr.bf16.mxu0 0
        %579 = vmatpush1.bf16.msra.mxu0 %v569
        %580 = vmatprep.subr.bf16.mxu0 0
        %581 = vmatpush1.bf16.msra.mxu0 0
        %582 = vmatprep.subr.bf16.mxu0 0
        %583 = vmatpush1.bf16.msra.mxu0 0
        %584 = vmatprep.subr.bf16.mxu0 0
        %585 = vmatpush1.bf16.msra.mxu0 0
        %586 = vmatprep.subr.bf16.mxu0 0
        %587 = vmatpush1.bf16.msra.mxu0 0
        %588 = vmatprep.subr.bf16.mxu0 0
        %589 = vmatpush1.bf16.msra.mxu0 0
        %590 = vmatprep.subr.bf16.mxu0 0
        %591 = vmatpush1.bf16.msra.mxu0 0
        %592 = vmatprep.subr.bf16.mxu0 0
        %593 = vmatpush1.bf16.msra.mxu0 0
        %594 = vmatprep.subr.bf16.mxu0 0
        %595 = vmatpush1.bf16.msra.mxu0 0
        %596 = vmatprep.subr.bf16.mxu0 0
        %597 = vmatpush1.bf16.msra.mxu0 0
        %598 = vmatprep.subr.bf16.mxu0 0
        %599 = vmatpush1.bf16.msra.mxu0 0
        %600 = vmatprep.subr.bf16.mxu0 0
        %601 = vmatpush1.bf16.msra.mxu0 0
        %602 = vmatprep.subr.bf16.mxu0 0
        %603 = vmatpush1.bf16.msra.mxu0 0
        %604 = vmatprep.subr.bf16.mxu0 0
        %605 = vmatpush1.bf16.msra.mxu0 0
        %606 = vmatprep.subr.bf16.mxu0 0
        %607 = vmatpush1.bf16.msra.mxu0 0
        %608 = vmatprep.mubr.bf16.mxu0 0
        %609 = vmatmul.mubr.bf16.gmra.mrb[0].mxu0 %v574
        %v610 = vpop.f32.mrb[0].mxu0
        %v611 = vadd.f32 0.0, %v610
        %v612 = vpop.f32.mrb[0].mxu0
        %v613 = vpop.f32.mrb[0].mxu0
        %v614 = vpop.f32.mrb[0].mxu0
        %615 = vdwg.mxu0
        %v616 = vld [vmem:[%s6] sm:$0xf]
        %v617 = vld [vmem:[%s6 + $0x4] sm:$0xf]
        %v618 = vld [vmem:[%s6 + $0x8] sm:$0xf]
        %v619 = vld [vmem:[%s6 + $0xc] sm:$0xf]
        %v624 = vunpack.c.l.b16 %v616
        %v625 = vunpack.c.l.b16 %v617
        %v626 = vunpack.c.l.b16 %v618
        %v627 = vunpack.c.l.b16 %v619
        %v628 = vpack.c.b16 %v625, %v624
        %v629 = vpack.c.b16 %v627, %v626
        %v633 = vsel %vm572, %v552, 0
        %v636 = vsel %vm572, %v553, 0
        %v639 = vsel %vm572, %v554, 0
        %v642 = vsel %vm572, %v555, 0
        %644 = vmatprep.subr.bf16.mxu0 0
        %645 = vmatpush1.bf16.msra.mxu0 %v628
        %646 = vmatprep.subr.bf16.mxu0 0
        %647 = vmatpush1.bf16.msra.mxu0 %v629
        %648 = vmatprep.subr.bf16.mxu0 0
        %649 = vmatpush1.bf16.msra.mxu0 0
        %650 = vmatprep.subr.bf16.mxu0 0
        %651 = vmatpush1.bf16.msra.mxu0 0
        %652 = vmatprep.subr.bf16.mxu0 0
        %653 = vmatpush1.bf16.msra.mxu0 0
        %654 = vmatprep.subr.bf16.mxu0 0
        %655 = vmatpush1.bf16.msra.mxu0 0
        %656 = vmatprep.subr.bf16.mxu0 0
        %657 = vmatpush1.bf16.msra.mxu0 0
        %658 = vmatprep.subr.bf16.mxu0 0
        %659 = vmatpush1.bf16.msra.mxu0 0
        %660 = vmatprep.subr.bf16.mxu0 0
        %661 = vmatpush1.bf16.msra.mxu0 0
        %662 = vmatprep.subr.bf16.mxu0 0
        %663 = vmatpush1.bf16.msra.mxu0 0
        %664 = vmatprep.subr.bf16.mxu0 0
        %665 = vmatpush1.bf16.msra.mxu0 0
        %666 = vmatprep.subr.bf16.mxu0 0
        %667 = vmatpush1.bf16.msra.mxu0 0
        %668 = vmatprep.subr.bf16.mxu0 0
        %669 = vmatpush1.bf16.msra.mxu0 0
        %670 = vmatprep.subr.bf16.mxu0 0
        %671 = vmatpush1.bf16.msra.mxu0 0
        %672 = vmatprep.subr.bf16.mxu0 0
        %673 = vmatpush1.bf16.msra.mxu0 0
        %674 = vmatprep.subr.bf16.mxu0 0
        %675 = vmatpush1.bf16.msra.mxu0 0
        %676 = vmatprep.mubr.bf16.mxu0 0
        %677 = vmatmul.mubr.bf16.gmra.mrb[0].mxu0 %v633
        %v678 = vpop.f32.mrb[0].mxu0
        %v679 = vadd.f32 0.0, %v678
        %v680 = vpop.f32.mrb[0].mxu0
        %v681 = vpop.f32.mrb[0].mxu0
        %v682 = vadd.f32 0.0, %v681
        %v683 = vpop.f32.mrb[0].mxu0
        %684 = vmatprep.mubr.bf16.mxu0 0
        %685 = vmatmul.mubr.bf16.gmra.mrb[0].mxu0 %v636
        %v686 = vpop.f32.mrb[0].mxu0
        %v687 = vadd.f32 0.0, %v686
        %v688 = vpop.f32.mrb[0].mxu0
        %v689 = vpop.f32.mrb[0].mxu0
        %v690 = vadd.f32 0.0, %v689
        %v691 = vpop.f32.mrb[0].mxu0
        %692 = vmatprep.mubr.bf16.mxu0 0
        %693 = vmatmul.mubr.bf16.gmra.mrb[0].mxu0 %v639
        %v694 = vpop.f32.mrb[0].mxu0
        %v695 = vadd.f32 0.0, %v694
        %v696 = vpop.f32.mrb[0].mxu0
        %v697 = vpop.f32.mrb[0].mxu0
        %v698 = vadd.f32 0.0, %v697
        %v699 = vpop.f32.mrb[0].mxu0
        %700 = vmatprep.mubr.bf16.mxu0 0
        %701 = vmatmul.mubr.bf16.gmra.mrb[0].mxu0 %v642
        %v702 = vpop.f32.mrb[0].mxu0
        %v703 = vadd.f32 0.0, %v702
        %v704 = vpop.f32.mrb[0].mxu0
        %v705 = vpop.f32.mrb[0].mxu0
        %v706 = vadd.f32 0.0, %v705
        %v707 = vpop.f32.mrb[0].mxu0
        %708 = vdwg.mxu0
        %v710 = vcombine.high %v611, %v611
        %v712 = vunpack.c.l.s4 1966171168
        %v713 = vunpack.c.0.s8 %v712
        %v714 = vlaneseq
        %v715 = vshrl.u32 %v714, 7
        %v716 = vsub.s32 %v713, %v715
        %v717 = vrot.slane %v611, %v716
        %v719 = vunpack.c.l.s4 1966171168
        %v720 = vunpack.c.0.s8 %v719
        %v721 = vlaneseq
        %v722 = vshrl.u32 %v721, 7
        %v723 = vsub.s32 %v720, %v722
        %v724 = vrot.slane %v710, %v723
        %v725 = vcombine.high %v717, %v717
        %v726 = vcombine.high %v724, %v724
        %v728 = vunpack.c.l.s4 1966171168
        %v729 = vunpack.c.0.s8 %v728
        %v730 = vlaneseq
        %v731 = vshrl.u32 %v730, 7
        %v732 = vsub.s32 %v729, %v731
        %v733 = vrot.slane %v717, %v732
        %v735 = vunpack.c.l.s4 1966171168
        %v736 = vunpack.c.0.s8 %v735
        %v737 = vlaneseq
        %v738 = vshrl.u32 %v737, 7
        %v739 = vsub.s32 %v736, %v738
        %v740 = vrot.slane %v724, %v739
        %v742 = vunpack.c.l.s4 1966171168
        %v743 = vunpack.c.0.s8 %v742
        %v744 = vlaneseq
        %v745 = vshrl.u32 %v744, 7
        %v746 = vsub.s32 %v743, %v745
        %v747 = vrot.slane %v725, %v746
        %v749 = vunpack.c.l.s4 1966171168
        %v750 = vunpack.c.0.s8 %v749
        %v751 = vlaneseq
        %v752 = vshrl.u32 %v751, 7
        %v753 = vsub.s32 %v750, %v752
        %v754 = vrot.slane %v726, %v753
        %v755 = vcombine.high %v733, %v733
        %v756 = vcombine.high %v740, %v740
        %v757 = vcombine.high %v747, %v747
        %v758 = vcombine.high %v754, %v754
        %v759 = vlaneseq
        %v760 = vshrl.u32 %v759, 7
        %v761 = vsub.s32 0, %v760
        %v762 = vrot.slane %v733, %v761
        %v763 = vlaneseq
        %v764 = vshrl.u32 %v763, 7
        %v765 = vsub.s32 0, %v764
        %v766 = vrot.slane %v747, %v765
        %v767 = vlaneseq
        %v768 = vshrl.u32 %v767, 7
        %v769 = vsub.s32 0, %v768
        %v770 = vrot.slane %v755, %v769
        %v771 = vlaneseq
        %v772 = vshrl.u32 %v771, 7
        %v773 = vsub.s32 0, %v772
        %v774 = vrot.slane %v757, %v773
        %v775 = vlaneseq
        %v776 = vshrl.u32 %v775, 7
        %v777 = vsub.s32 0, %v776
        %v778 = vrot.slane %v740, %v777
        %v779 = vlaneseq
        %v780 = vshrl.u32 %v779, 7
        %v781 = vsub.s32 0, %v780
        %v782 = vrot.slane %v754, %v781
        %v783 = vlaneseq
        %v784 = vshrl.u32 %v783, 7
        %v785 = vsub.s32 0, %v784
        %v786 = vrot.slane %v756, %v785
        %v787 = vlaneseq
        %v788 = vshrl.u32 %v787, 7
        %v789 = vsub.s32 0, %v788
        %v790 = vrot.slane %v758, %v789
        %v799 = vadd.f32 %v679, %v762
        %v800 = vadd.f32 %v682, %v766
        %v801 = vadd.f32 %v687, %v770
        %v802 = vadd.f32 %v690, %v774
        %v803 = vadd.f32 %v695, %v778
        %v804 = vadd.f32 %v698, %v782
        %v805 = vadd.f32 %v703, %v786
        %v806 = vadd.f32 %v706, %v790
        %807 = vrot.lane.b32.xlu0 %v611, 96
        %v808 = vpop.permute.xlu0 %807
        %v810 = vadd.f32 %v799, %v808
        %v811 = vadd.f32 %v800, %v808
        %v812 = vadd.f32 %v801, %v808
        %v813 = vadd.f32 %v802, %v808
        %v814 = vadd.f32 %v803, %v808
        %v815 = vadd.f32 %v804, %v808
        %v816 = vadd.f32 %v805, %v808
        %v817 = vadd.f32 %v806, %v808
        %v818 = vtanh.pop %v810
        %v819 = vtanh.pop %v811
        %v820 = vtanh.pop %v812
        %v821 = vtanh.pop %v813
        %v822 = vtanh.pop %v814
        %v823 = vtanh.pop %v815
        %v824 = vtanh.pop %v816
        %v825 = vtanh.pop %v817
        %v826 = vtanh.pop %v679
        %v827 = vtanh.pop %v682
        %v828 = vtanh.pop %v687
        %v829 = vtanh.pop %v690
        %v830 = vtanh.pop %v695
        %v831 = vtanh.pop %v698
        %v832 = vtanh.pop %v703
        %v833 = vtanh.pop %v706
        %v834 = vlaneseq
        %v835 = vshrl.u32 %v834, 7
        %v836 = vsub.s32 0, %v835
        %v837 = vrot.slane %v380, %v836
        %v838 = vmul.f32 %v818, %v837
        %v839 = vmul.f32 %v819, %v837
        %v840 = vmul.f32 %v820, %v837
        %v841 = vmul.f32 %v821, %v837
        %v842 = vmul.f32 %v822, %v837
        %v843 = vmul.f32 %v823, %v837
        %v844 = vmul.f32 %v824, %v837
        %v845 = vmul.f32 %v825, %v837
        %v846 = vsel %vm572, %v838, 0.0
        %847 = vadd.xlane.f32.xlu0 %v846
        %v848 = vpop.xlane.xlu0 %847
        %v849 = vsel %vm572, %v839, 0.0
        %850 = vadd.xlane.f32.xlu0 %v849
        %v851 = vpop.xlane.xlu0 %850
        %v852 = vsel %vm572, %v840, 0.0
        %853 = vadd.xlane.f32.xlu0 %v852
        %v854 = vpop.xlane.xlu0 %853
        %v855 = vsel %vm572, %v841, 0.0
        %856 = vadd.xlane.f32.xlu0 %v855
        %v857 = vpop.xlane.xlu0 %856
        %v858 = vsel %vm572, %v842, 0.0
        %859 = vadd.xlane.f32.xlu0 %v858
        %v860 = vpop.xlane.xlu0 %859
        %v861 = vsel %vm572, %v843, 0.0
        %862 = vadd.xlane.f32.xlu0 %v861
        %v863 = vpop.xlane.xlu0 %862
        %v864 = vsel %vm572, %v844, 0.0
        %865 = vadd.xlane.f32.xlu0 %v864
        %v866 = vpop.xlane.xlu0 %865
        %v867 = vsel %vm572, %v845, 0.0
        %868 = vadd.xlane.f32.xlu0 %v867
        %v869 = vpop.xlane.xlu0 %868
        %v870 = vlaneseq
        %v871 = vshrl.u32 %v870, 7
        %v872 = vsub.s32 0, %v871
        %v873 = vrot.slane %v381, %v872
        %875 = vrot.lane.b32.xlu0 %v873, 32
        %v876 = vpop.permute.xlu0 %875
        %v878 = vmul.f32 %v826, %v876
        %v879 = vmul.f32 %v827, %v876
        %v880 = vmul.f32 %v828, %v876
        %v881 = vmul.f32 %v829, %v876
        %v882 = vmul.f32 %v830, %v876
        %v883 = vmul.f32 %v831, %v876
        %v884 = vmul.f32 %v832, %v876
        %v885 = vmul.f32 %v833, %v876
        %894 = vrot.lane.b32.xlu0 %v878, 96
        %v895 = vpop.permute.xlu0 %894
        %896 = vrot.lane.b32.xlu0 %v879, 96
        %v897 = vpop.permute.xlu0 %896
        %898 = vrot.lane.b32.xlu0 %v880, 96
        %v899 = vpop.permute.xlu0 %898
        %900 = vrot.lane.b32.xlu0 %v881, 96
        %v901 = vpop.permute.xlu0 %900
        %902 = vrot.lane.b32.xlu0 %v882, 96
        %v903 = vpop.permute.xlu0 %902
        %904 = vrot.lane.b32.xlu0 %v883, 96
        %v905 = vpop.permute.xlu0 %904
        %906 = vrot.lane.b32.xlu0 %v884, 96
        %v907 = vpop.permute.xlu0 %906
        %908 = vrot.lane.b32.xlu0 %v885, 96
        %v909 = vpop.permute.xlu0 %908
        %v918 = vsel %vm572, %v895, 0.0
        %919 = vadd.xlane.f32.xlu0 %v918
        %v920 = vpop.xlane.xlu0 %919
        %v921 = vsel %vm572, %v897, 0.0
        %922 = vadd.xlane.f32.xlu0 %v921
        %v923 = vpop.xlane.xlu0 %922
        %v924 = vsel %vm572, %v899, 0.0
        %925 = vadd.xlane.f32.xlu0 %v924
        %v926 = vpop.xlane.xlu0 %925
        %v927 = vsel %vm572, %v901, 0.0
        %928 = vadd.xlane.f32.xlu0 %v927
        %v929 = vpop.xlane.xlu0 %928
        %v930 = vsel %vm572, %v903, 0.0
        %931 = vadd.xlane.f32.xlu0 %v930
        %v932 = vpop.xlane.xlu0 %931
        %v933 = vsel %vm572, %v905, 0.0
        %934 = vadd.xlane.f32.xlu0 %v933
        %v935 = vpop.xlane.xlu0 %934
        %v936 = vsel %vm572, %v907, 0.0
        %937 = vadd.xlane.f32.xlu0 %v936
        %v938 = vpop.xlane.xlu0 %937
        %v939 = vsel %vm572, %v909, 0.0
        %940 = vadd.xlane.f32.xlu0 %v939
        %v941 = vpop.xlane.xlu0 %940
        %v942 = vmul.f32 %v848, 1.442695
        %v943 = vpow.pop %v942
        %v944 = vmul.f32 %v851, 1.442695
        %v945 = vpow.pop %v944
        %v946 = vmul.f32 %v854, 1.442695
        %v947 = vpow.pop %v946
        %v948 = vmul.f32 %v857, 1.442695
        %v949 = vpow.pop %v948
        %v950 = vmul.f32 %v860, 1.442695
        %v951 = vpow.pop %v950
        %v952 = vmul.f32 %v863, 1.442695
        %v953 = vpow.pop %v952
        %v954 = vmul.f32 %v866, 1.442695
        %v955 = vpow.pop %v954
        %v956 = vmul.f32 %v869, 1.442695
        %v957 = vpow.pop %v956
        %v966 = vlaneseq
        %v967 = vand.u32 %v966, 127
        %v968 = vlaneseq
        %v969 = vshrl.u32 %v968, 7
        %v970 = vsub.s32 %v967, %v969
        %v971 = vrot.slane %v943, %v970
        %v972 = vlaneseq
        %v973 = vshrl.u32 %v972, 7
        %v974 = vsub.s32 %v967, %v973
        %v975 = vrot.slane %v945, %v974
        %v976 = vlaneseq
        %v977 = vshrl.u32 %v976, 7
        %v978 = vsub.s32 %v967, %v977
        %v979 = vrot.slane %v947, %v978
        %v980 = vlaneseq
        %v981 = vshrl.u32 %v980, 7
        %v982 = vsub.s32 %v967, %v981
        %v983 = vrot.slane %v949, %v982
        %v984 = vlaneseq
        %v985 = vshrl.u32 %v984, 7
        %v986 = vsub.s32 %v967, %v985
        %v987 = vrot.slane %v951, %v986
        %v988 = vlaneseq
        %v989 = vshrl.u32 %v988, 7
        %v990 = vsub.s32 %v967, %v989
        %v991 = vrot.slane %v953, %v990
        %v992 = vlaneseq
        %v993 = vshrl.u32 %v992, 7
        %v994 = vsub.s32 %v967, %v993
        %v995 = vrot.slane %v955, %v994
        %v996 = vlaneseq
        %v997 = vshrl.u32 %v996, 7
        %v998 = vsub.s32 %v967, %v997
        %v999 = vrot.slane %v957, %v998
        %vm1000 = vcmask 1041409
        %v1001 = vsel %vm1000, %v975, %v971
        %vm1002 = vcmask 1042434
        %v1003 = vsel %vm1002, %v979, %v1001
        %vm1004 = vcmask 1043459
        %v1005 = vsel %vm1004, %v983, %v1003
        %vm1006 = vcmask 1044484
        %v1007 = vsel %vm1006, %v987, %v1005
        %vm1008 = vcmask 1045509
        %v1009 = vsel %vm1008, %v991, %v1007
        %vm1010 = vcmask 1046534
        %v1011 = vsel %vm1010, %v995, %v1009
        %vm1012 = vcmask 1047559
        %v1013 = vsel %vm1012, %v999, %v1011
        %v1015 = vmul.f32 %v367, %v1013
        %vm1016 = vcmask 64512
        %v1017 = vsel %vm1016, %v1015, 0.0
        %1018 = vadd.xlane.f32.xlu0 %v1017
        %v1019 = vpop.xlane.xlu0 %1018
        %v1020 = vmax.f32 %v1019, 1e-06
        %v1021 = vrcp.pop %v1020
        %v1022 = vmul.f32 1.0, %v1021
        %v1023 = vmul.f32 %v1015, %v1022
        %v1024 = vmul.f32 %v920, 1.442695
        %v1025 = vpow.pop %v1024
        %v1026 = vmul.f32 %v923, 1.442695
        %v1027 = vpow.pop %v1026
        %v1028 = vmul.f32 %v926, 1.442695
        %v1029 = vpow.pop %v1028
        %v1030 = vmul.f32 %v929, 1.442695
        %v1031 = vpow.pop %v1030
        %v1032 = vmul.f32 %v932, 1.442695
        %v1033 = vpow.pop %v1032
        %v1034 = vmul.f32 %v935, 1.442695
        %v1035 = vpow.pop %v1034
        %v1036 = vmul.f32 %v938, 1.442695
        %v1037 = vpow.pop %v1036
        %v1038 = vmul.f32 %v941, 1.442695
        %v1039 = vpow.pop %v1038
        %v1048 = vlaneseq
        %v1049 = vshrl.u32 %v1048, 7
        %v1050 = vsub.s32 %v967, %v1049
        %v1051 = vrot.slane %v1025, %v1050
        %v1052 = vlaneseq
        %v1053 = vshrl.u32 %v1052, 7
        %v1054 = vsub.s32 %v967, %v1053
        %v1055 = vrot.slane %v1027, %v1054
        %v1056 = vlaneseq
        %v1057 = vshrl.u32 %v1056, 7
        %v1058 = vsub.s32 %v967, %v1057
        %v1059 = vrot.slane %v1029, %v1058
        %v1060 = vlaneseq
        %v1061 = vshrl.u32 %v1060, 7
        %v1062 = vsub.s32 %v967, %v1061
        %v1063 = vrot.slane %v1031, %v1062
        %v1064 = vlaneseq
        %v1065 = vshrl.u32 %v1064, 7
        %v1066 = vsub.s32 %v967, %v1065
        %v1067 = vrot.slane %v1033, %v1066
        %v1068 = vlaneseq
        %v1069 = vshrl.u32 %v1068, 7
        %v1070 = vsub.s32 %v967, %v1069
        %v1071 = vrot.slane %v1035, %v1070
        %v1072 = vlaneseq
        %v1073 = vshrl.u32 %v1072, 7
        %v1074 = vsub.s32 %v967, %v1073
        %v1075 = vrot.slane %v1037, %v1074
        %v1076 = vlaneseq
        %v1077 = vshrl.u32 %v1076, 7
        %v1078 = vsub.s32 %v967, %v1077
        %v1079 = vrot.slane %v1039, %v1078
        %v1080 = vsel %vm1000, %v1055, %v1051
        %v1081 = vsel %vm1002, %v1059, %v1080
        %v1082 = vsel %vm1004, %v1063, %v1081
        %v1083 = vsel %vm1006, %v1067, %v1082
        %v1084 = vsel %vm1008, %v1071, %v1083
        %v1085 = vsel %vm1010, %v1075, %v1084
        %v1086 = vsel %vm1012, %v1079, %v1085
        %v1088 = vmul.f32 %v367, %v1086
        %v1089 = vsel %vm1016, %v1088, 0.0
        %1090 = vadd.xlane.f32.xlu0 %v1089
        %v1091 = vpop.xlane.xlu0 %1090
        %v1092 = vmax.f32 %v1091, 1e-06
        %v1093 = vrcp.pop %v1092
        %v1094 = vmul.f32 1.0, %v1093
        %v1095 = vmul.f32 %v1088, %v1094
        %v1097 = vsel %vm1016, %v1023, 0
        %1099 = vmatprep.subr.mxu0 0.0
        %1100 = vmatpush1.msra.mxu0 %v435
        %1101 = vmatprep.subr.mxu0 0.0
        %1102 = vmatpush1.msra.mxu0 0.0
        %1103 = vmatprep.subr.mxu0 0.0
        %1104 = vmatpush1.msra.mxu0 0.0
        %1105 = vmatprep.subr.mxu0 0.0
        %1106 = vmatpush1.msra.mxu0 0.0
        %1107 = vmatprep.subr.mxu0 0.0
        %1108 = vmatpush1.msra.mxu0 0.0
        %1109 = vmatprep.subr.mxu0 0.0
        %1110 = vmatpush1.msra.mxu0 0.0
        %1111 = vmatprep.subr.mxu0 0.0
        %1112 = vmatpush1.msra.mxu0 0.0
        %1113 = vmatprep.subr.mxu0 0.0
        %1114 = vmatpush1.msra.mxu0 0.0
        %1115 = vmatprep.subr.mxu0 0.0
        %1116 = vmatpush1.msra.mxu0 0.0
        %1117 = vmatprep.subr.mxu0 0.0
        %1118 = vmatpush1.msra.mxu0 0.0
        %1119 = vmatprep.subr.mxu0 0.0
        %1120 = vmatpush1.msra.mxu0 0.0
        %1121 = vmatprep.subr.mxu0 0.0
        %1122 = vmatpush1.msra.mxu0 0.0
        %1123 = vmatprep.subr.mxu0 0.0
        %1124 = vmatpush1.msra.mxu0 0.0
        %1125 = vmatprep.subr.mxu0 0.0
        %1126 = vmatpush1.msra.mxu0 0.0
        %1127 = vmatprep.subr.mxu0 0.0
        %1128 = vmatpush1.msra.mxu0 0.0
        %1129 = vmatprep.subr.mxu0 0.0
        %1130 = vmatpush1.msra.mxu0 0.0
        %1131 = vmatprep.subr.mxu0 0.0
        %1132 = vmatpush1.msra.mxu0 0.0
        %1133 = vmatprep.subr.mxu0 0.0
        %1134 = vmatpush1.msra.mxu0 0.0
        %1135 = vmatprep.subr.mxu0 0.0
        %1136 = vmatpush1.msra.mxu0 0.0
        %1137 = vmatprep.subr.mxu0 0.0
        %1138 = vmatpush1.msra.mxu0 0.0
        %1139 = vmatprep.subr.mxu0 0.0
        %1140 = vmatpush1.msra.mxu0 0.0
        %1141 = vmatprep.subr.mxu0 0.0
        %1142 = vmatpush1.msra.mxu0 0.0
        %1143 = vmatprep.subr.mxu0 0.0
        %1144 = vmatpush1.msra.mxu0 0.0
        %1145 = vmatprep.subr.mxu0 0.0
        %1146 = vmatpush1.msra.mxu0 0.0
        %1147 = vmatprep.subr.mxu0 0.0
        %1148 = vmatpush1.msra.mxu0 0.0
        %1149 = vmatprep.subr.mxu0 0.0
        %1150 = vmatpush1.msra.mxu0 0.0
        %1151 = vmatprep.subr.mxu0 0.0
        %1152 = vmatpush1.msra.mxu0 0.0
        %1153 = vmatprep.subr.mxu0 0.0
        %1154 = vmatpush1.msra.mxu0 0.0
        %1155 = vmatprep.subr.mxu0 0.0
        %1156 = vmatpush1.msra.mxu0 0.0
        %1157 = vmatprep.subr.mxu0 0.0
        %1158 = vmatpush1.msra.mxu0 0.0
        %1159 = vmatprep.subr.mxu0 0.0
        %1160 = vmatpush1.msra.mxu0 0.0
        %1161 = vmatprep.subr.mxu0 0.0
        %1162 = vmatpush1.msra.mxu0 0.0
        %1163 = vmatprep.mubr.f32.mxu0 0.0
        %1164 = vmatmul.mubr.f32.gmra.mrb[0].mxu0 %v1097
        %v1165 = vpop.f32.mrb[0].mxu0
        %v1166 = vadd.f32 0.0, %v1165
        %v1167 = vpop.f32.mrb[0].mxu0
        %1168 = vdwg.mxu0
        %v1170 = vcombine.high %v1095, %v1095
        %v1172 = vunpack.c.l.s4 1966171168
        %v1173 = vunpack.c.0.s8 %v1172
        %v1174 = vlaneseq
        %v1175 = vshrl.u32 %v1174, 7
        %v1176 = vsub.s32 %v1173, %v1175
        %v1177 = vrot.slane %v1095, %v1176
        %v1179 = vunpack.c.l.s4 1966171168
        %v1180 = vunpack.c.0.s8 %v1179
        %v1181 = vlaneseq
        %v1182 = vshrl.u32 %v1181, 7
        %v1183 = vsub.s32 %v1180, %v1182
        %v1184 = vrot.slane %v1170, %v1183
        %v1185 = vcombine.high %v1177, %v1177
        %v1186 = vcombine.high %v1184, %v1184
        %v1188 = vunpack.c.l.s4 1966171168
        %v1189 = vunpack.c.0.s8 %v1188
        %v1190 = vlaneseq
        %v1191 = vshrl.u32 %v1190, 7
        %v1192 = vsub.s32 %v1189, %v1191
        %v1193 = vrot.slane %v1177, %v1192
        %v1195 = vunpack.c.l.s4 1966171168
        %v1196 = vunpack.c.0.s8 %v1195
        %v1197 = vlaneseq
        %v1198 = vshrl.u32 %v1197, 7
        %v1199 = vsub.s32 %v1196, %v1198
        %v1200 = vrot.slane %v1184, %v1199
        %v1202 = vunpack.c.l.s4 1966171168
        %v1203 = vunpack.c.0.s8 %v1202
        %v1204 = vlaneseq
        %v1205 = vshrl.u32 %v1204, 7
        %v1206 = vsub.s32 %v1203, %v1205
        %v1207 = vrot.slane %v1185, %v1206
        %v1209 = vunpack.c.l.s4 1966171168
        %v1210 = vunpack.c.0.s8 %v1209
        %v1211 = vlaneseq
        %v1212 = vshrl.u32 %v1211, 7
        %v1213 = vsub.s32 %v1210, %v1212
        %v1214 = vrot.slane %v1186, %v1213
        %v1215 = vcombine.high %v1193, %v1193
        %v1216 = vcombine.high %v1200, %v1200
        %v1217 = vcombine.high %v1207, %v1207
        %v1218 = vcombine.high %v1214, %v1214
        %v1219 = vsel %vm1016, %v1193, 0
        %1221 = vmatprep.subr.mxu0 0.0
        %1222 = vmatpush1.msra.mxu0 %v543
        %1223 = vmatprep.subr.mxu0 0.0
        %1224 = vmatpush1.msra.mxu0 0.0
        %1225 = vmatprep.subr.mxu0 0.0
        %1226 = vmatpush1.msra.mxu0 0.0
        %1227 = vmatprep.subr.mxu0 0.0
        %1228 = vmatpush1.msra.mxu0 0.0
        %1229 = vmatprep.subr.mxu0 0.0
        %1230 = vmatpush1.msra.mxu0 0.0
        %1231 = vmatprep.subr.mxu0 0.0
        %1232 = vmatpush1.msra.mxu0 0.0
        %1233 = vmatprep.subr.mxu0 0.0
        %1234 = vmatpush1.msra.mxu0 0.0
        %1235 = vmatprep.subr.mxu0 0.0
        %1236 = vmatpush1.msra.mxu0 0.0
        %1237 = vmatprep.subr.mxu0 0.0
        %1238 = vmatpush1.msra.mxu0 0.0
        %1239 = vmatprep.subr.mxu0 0.0
        %1240 = vmatpush1.msra.mxu0 0.0
        %1241 = vmatprep.subr.mxu0 0.0
        %1242 = vmatpush1.msra.mxu0 0.0
        %1243 = vmatprep.subr.mxu0 0.0
        %1244 = vmatpush1.msra.mxu0 0.0
        %1245 = vmatprep.subr.mxu0 0.0
        %1246 = vmatpush1.msra.mxu0 0.0
        %1247 = vmatprep.subr.mxu0 0.0
        %1248 = vmatpush1.msra.mxu0 0.0
        %1249 = vmatprep.subr.mxu0 0.0
        %1250 = vmatpush1.msra.mxu0 0.0
        %1251 = vmatprep.subr.mxu0 0.0
        %1252 = vmatpush1.msra.mxu0 0.0
        %1253 = vmatprep.subr.mxu0 0.0
        %1254 = vmatpush1.msra.mxu0 0.0
        %1255 = vmatprep.subr.mxu0 0.0
        %1256 = vmatpush1.msra.mxu0 0.0
        %1257 = vmatprep.subr.mxu0 0.0
        %1258 = vmatpush1.msra.mxu0 0.0
        %1259 = vmatprep.subr.mxu0 0.0
        %1260 = vmatpush1.msra.mxu0 0.0
        %1261 = vmatprep.subr.mxu0 0.0
        %1262 = vmatpush1.msra.mxu0 0.0
        %1263 = vmatprep.subr.mxu0 0.0
        %1264 = vmatpush1.msra.mxu0 0.0
        %1265 = vmatprep.subr.mxu0 0.0
        %1266 = vmatpush1.msra.mxu0 0.0
        %1267 = vmatprep.subr.mxu0 0.0
        %1268 = vmatpush1.msra.mxu0 0.0
        %1269 = vmatprep.subr.mxu0 0.0
        %1270 = vmatpush1.msra.mxu0 0.0
        %1271 = vmatprep.subr.mxu0 0.0
        %1272 = vmatpush1.msra.mxu0 0.0
        %1273 = vmatprep.subr.mxu0 0.0
        %1274 = vmatpush1.msra.mxu0 0.0
        %1275 = vmatprep.subr.mxu0 0.0
        %1276 = vmatpush1.msra.mxu0 0.0
        %1277 = vmatprep.subr.mxu0 0.0
        %1278 = vmatpush1.msra.mxu0 0.0
        %1279 = vmatprep.subr.mxu0 0.0
        %1280 = vmatpush1.msra.mxu0 0.0
        %1281 = vmatprep.subr.mxu0 0.0
        %1282 = vmatpush1.msra.mxu0 0.0
        %1283 = vmatprep.subr.mxu0 0.0
        %1284 = vmatpush1.msra.mxu0 0.0
        %1285 = vmatprep.mubr.f32.mxu0 0.0
        %1286 = vmatmul.mubr.f32.gmra.mrb[0].mxu0 %v1219
        %v1287 = vpop.f32.mrb[0].mxu0
        %v1288 = vadd.f32 0.0, %v1287
        %v1289 = vpop.f32.mrb[0].mxu0
        %1290 = vdwg.mxu0
        %v1291 = vsel %vm1016, %v1207, 0
        %1293 = vmatprep.subr.mxu0 0.0
        %1294 = vmatpush1.msra.mxu0 %v544
        %1295 = vmatprep.subr.mxu0 0.0
        %1296 = vmatpush1.msra.mxu0 0.0
        %1297 = vmatprep.subr.mxu0 0.0
        %1298 = vmatpush1.msra.mxu0 0.0
        %1299 = vmatprep.subr.mxu0 0.0
        %1300 = vmatpush1.msra.mxu0 0.0
        %1301 = vmatprep.subr.mxu0 0.0
        %1302 = vmatpush1.msra.mxu0 0.0
        %1303 = vmatprep.subr.mxu0 0.0
        %1304 = vmatpush1.msra.mxu0 0.0
        %1305 = vmatprep.subr.mxu0 0.0
        %1306 = vmatpush1.msra.mxu0 0.0
        %1307 = vmatprep.subr.mxu0 0.0
        %1308 = vmatpush1.msra.mxu0 0.0
        %1309 = vmatprep.subr.mxu0 0.0
        %1310 = vmatpush1.msra.mxu0 0.0
        %1311 = vmatprep.subr.mxu0 0.0
        %1312 = vmatpush1.msra.mxu0 0.0
        %1313 = vmatprep.subr.mxu0 0.0
        %1314 = vmatpush1.msra.mxu0 0.0
        %1315 = vmatprep.subr.mxu0 0.0
        %1316 = vmatpush1.msra.mxu0 0.0
        %1317 = vmatprep.subr.mxu0 0.0
        %1318 = vmatpush1.msra.mxu0 0.0
        %1319 = vmatprep.subr.mxu0 0.0
        %1320 = vmatpush1.msra.mxu0 0.0
        %1321 = vmatprep.subr.mxu0 0.0
        %1322 = vmatpush1.msra.mxu0 0.0
        %1323 = vmatprep.subr.mxu0 0.0
        %1324 = vmatpush1.msra.mxu0 0.0
        %1325 = vmatprep.subr.mxu0 0.0
        %1326 = vmatpush1.msra.mxu0 0.0
        %1327 = vmatprep.subr.mxu0 0.0
        %1328 = vmatpush1.msra.mxu0 0.0
        %1329 = vmatprep.subr.mxu0 0.0
        %1330 = vmatpush1.msra.mxu0 0.0
        %1331 = vmatprep.subr.mxu0 0.0
        %1332 = vmatpush1.msra.mxu0 0.0
        %1333 = vmatprep.subr.mxu0 0.0
        %1334 = vmatpush1.msra.mxu0 0.0
        %1335 = vmatprep.subr.mxu0 0.0
        %1336 = vmatpush1.msra.mxu0 0.0
        %1337 = vmatprep.subr.mxu0 0.0
        %1338 = vmatpush1.msra.mxu0 0.0
        %1339 = vmatprep.subr.mxu0 0.0
        %1340 = vmatpush1.msra.mxu0 0.0
        %1341 = vmatprep.subr.mxu0 0.0
        %1342 = vmatpush1.msra.mxu0 0.0
        %1343 = vmatprep.subr.mxu0 0.0
        %1344 = vmatpush1.msra.mxu0 0.0
        %1345 = vmatprep.subr.mxu0 0.0
        %1346 = vmatpush1.msra.mxu0 0.0
        %1347 = vmatprep.subr.mxu0 0.0
        %1348 = vmatpush1.msra.mxu0 0.0
        %1349 = vmatprep.subr.mxu0 0.0
        %1350 = vmatpush1.msra.mxu0 0.0
        %1351 = vmatprep.subr.mxu0 0.0
        %1352 = vmatpush1.msra.mxu0 0.0
        %1353 = vmatprep.subr.mxu0 0.0
        %1354 = vmatpush1.msra.mxu0 0.0
        %1355 = vmatprep.subr.mxu0 0.0
        %1356 = vmatpush1.msra.mxu0 0.0
        %1357 = vmatprep.mubr.f32.mxu0 0.0
        %1358 = vmatmul.mubr.f32.gmra.mrb[0].mxu0 %v1291
        %v1359 = vpop.f32.mrb[0].mxu0
        %v1360 = vadd.f32 0.0, %v1359
        %v1361 = vpop.f32.mrb[0].mxu0
        %1362 = vdwg.mxu0
        %v1363 = vsel %vm1016, %v1215, 0
        %1365 = vmatprep.subr.mxu0 0.0
        %1366 = vmatpush1.msra.mxu0 %v545
        %1367 = vmatprep.subr.mxu0 0.0
        %1368 = vmatpush1.msra.mxu0 0.0
        %1369 = vmatprep.subr.mxu0 0.0
        %1370 = vmatpush1.msra.mxu0 0.0
        %1371 = vmatprep.subr.mxu0 0.0
        %1372 = vmatpush1.msra.mxu0 0.0
        %1373 = vmatprep.subr.mxu0 0.0
        %1374 = vmatpush1.msra.mxu0 0.0
        %1375 = vmatprep.subr.mxu0 0.0
        %1376 = vmatpush1.msra.mxu0 0.0
        %1377 = vmatprep.subr.mxu0 0.0
        %1378 = vmatpush1.msra.mxu0 0.0
        %1379 = vmatprep.subr.mxu0 0.0
        %1380 = vmatpush1.msra.mxu0 0.0
        %1381 = vmatprep.subr.mxu0 0.0
        %1382 = vmatpush1.msra.mxu0 0.0
        %1383 = vmatprep.subr.mxu0 0.0
        %1384 = vmatpush1.msra.mxu0 0.0
        %1385 = vmatprep.subr.mxu0 0.0
        %1386 = vmatpush1.msra.mxu0 0.0
        %1387 = vmatprep.subr.mxu0 0.0
        %1388 = vmatpush1.msra.mxu0 0.0
        %1389 = vmatprep.subr.mxu0 0.0
        %1390 = vmatpush1.msra.mxu0 0.0
        %1391 = vmatprep.subr.mxu0 0.0
        %1392 = vmatpush1.msra.mxu0 0.0
        %1393 = vmatprep.subr.mxu0 0.0
        %1394 = vmatpush1.msra.mxu0 0.0
        %1395 = vmatprep.subr.mxu0 0.0
        %1396 = vmatpush1.msra.mxu0 0.0
        %1397 = vmatprep.subr.mxu0 0.0
        %1398 = vmatpush1.msra.mxu0 0.0
        %1399 = vmatprep.subr.mxu0 0.0
        %1400 = vmatpush1.msra.mxu0 0.0
        %1401 = vmatprep.subr.mxu0 0.0
        %1402 = vmatpush1.msra.mxu0 0.0
        %1403 = vmatprep.subr.mxu0 0.0
        %1404 = vmatpush1.msra.mxu0 0.0
        %1405 = vmatprep.subr.mxu0 0.0
        %1406 = vmatpush1.msra.mxu0 0.0
        %1407 = vmatprep.subr.mxu0 0.0
        %1408 = vmatpush1.msra.mxu0 0.0
        %1409 = vmatprep.subr.mxu0 0.0
        %1410 = vmatpush1.msra.mxu0 0.0
        %1411 = vmatprep.subr.mxu0 0.0
        %1412 = vmatpush1.msra.mxu0 0.0
        %1413 = vmatprep.subr.mxu0 0.0
        %1414 = vmatpush1.msra.mxu0 0.0
        %1415 = vmatprep.subr.mxu0 0.0
        %1416 = vmatpush1.msra.mxu0 0.0
        %1417 = vmatprep.subr.mxu0 0.0
        %1418 = vmatpush1.msra.mxu0 0.0
        %1419 = vmatprep.subr.mxu0 0.0
        %1420 = vmatpush1.msra.mxu0 0.0
        %1421 = vmatprep.subr.mxu0 0.0
        %1422 = vmatpush1.msra.mxu0 0.0
        %1423 = vmatprep.subr.mxu0 0.0
        %1424 = vmatpush1.msra.mxu0 0.0
        %1425 = vmatprep.subr.mxu0 0.0
        %1426 = vmatpush1.msra.mxu0 0.0
        %1427 = vmatprep.subr.mxu0 0.0
        %1428 = vmatpush1.msra.mxu0 0.0
        %1429 = vmatprep.mubr.f32.mxu0 0.0
        %1430 = vmatmul.mubr.f32.gmra.mrb[0].mxu0 %v1363
        %v1431 = vpop.f32.mrb[0].mxu0
        %v1432 = vadd.f32 0.0, %v1431
        %v1433 = vpop.f32.mrb[0].mxu0
        %1434 = vdwg.mxu0
        %v1435 = vsel %vm1016, %v1217, 0
        %1437 = vmatprep.subr.mxu0 0.0
        %1438 = vmatpush1.msra.mxu0 %v546
        %1439 = vmatprep.subr.mxu0 0.0
        %1440 = vmatpush1.msra.mxu0 0.0
        %1441 = vmatprep.subr.mxu0 0.0
        %1442 = vmatpush1.msra.mxu0 0.0
        %1443 = vmatprep.subr.mxu0 0.0
        %1444 = vmatpush1.msra.mxu0 0.0
        %1445 = vmatprep.subr.mxu0 0.0
        %1446 = vmatpush1.msra.mxu0 0.0
        %1447 = vmatprep.subr.mxu0 0.0
        %1448 = vmatpush1.msra.mxu0 0.0
        %1449 = vmatprep.subr.mxu0 0.0
        %1450 = vmatpush1.msra.mxu0 0.0
        %1451 = vmatprep.subr.mxu0 0.0
        %1452 = vmatpush1.msra.mxu0 0.0
        %1453 = vmatprep.subr.mxu0 0.0
        %1454 = vmatpush1.msra.mxu0 0.0
        %1455 = vmatprep.subr.mxu0 0.0
        %1456 = vmatpush1.msra.mxu0 0.0
        %1457 = vmatprep.subr.mxu0 0.0
        %1458 = vmatpush1.msra.mxu0 0.0
        %1459 = vmatprep.subr.mxu0 0.0
        %1460 = vmatpush1.msra.mxu0 0.0
        %1461 = vmatprep.subr.mxu0 0.0
        %1462 = vmatpush1.msra.mxu0 0.0
        %1463 = vmatprep.subr.mxu0 0.0
        %1464 = vmatpush1.msra.mxu0 0.0
        %1465 = vmatprep.subr.mxu0 0.0
        %1466 = vmatpush1.msra.mxu0 0.0
        %1467 = vmatprep.subr.mxu0 0.0
        %1468 = vmatpush1.msra.mxu0 0.0
        %1469 = vmatprep.subr.mxu0 0.0
        %1470 = vmatpush1.msra.mxu0 0.0
        %1471 = vmatprep.subr.mxu0 0.0
        %1472 = vmatpush1.msra.mxu0 0.0
        %1473 = vmatprep.subr.mxu0 0.0
        %1474 = vmatpush1.msra.mxu0 0.0
        %1475 = vmatprep.subr.mxu0 0.0
        %1476 = vmatpush1.msra.mxu0 0.0
        %1477 = vmatprep.subr.mxu0 0.0
        %1478 = vmatpush1.msra.mxu0 0.0
        %1479 = vmatprep.subr.mxu0 0.0
        %1480 = vmatpush1.msra.mxu0 0.0
        %1481 = vmatprep.subr.mxu0 0.0
        %1482 = vmatpush1.msra.mxu0 0.0
        %1483 = vmatprep.subr.mxu0 0.0
        %1484 = vmatpush1.msra.mxu0 0.0
        %1485 = vmatprep.subr.mxu0 0.0
        %1486 = vmatpush1.msra.mxu0 0.0
        %1487 = vmatprep.subr.mxu0 0.0
        %1488 = vmatpush1.msra.mxu0 0.0
        %1489 = vmatprep.subr.mxu0 0.0
        %1490 = vmatpush1.msra.mxu0 0.0
        %1491 = vmatprep.subr.mxu0 0.0
        %1492 = vmatpush1.msra.mxu0 0.0
        %1493 = vmatprep.subr.mxu0 0.0
        %1494 = vmatpush1.msra.mxu0 0.0
        %1495 = vmatprep.subr.mxu0 0.0
        %1496 = vmatpush1.msra.mxu0 0.0
        %1497 = vmatprep.subr.mxu0 0.0
        %1498 = vmatpush1.msra.mxu0 0.0
        %1499 = vmatprep.subr.mxu0 0.0
        %1500 = vmatpush1.msra.mxu0 0.0
        %1501 = vmatprep.mubr.f32.mxu0 0.0
        %1502 = vmatmul.mubr.f32.gmra.mrb[0].mxu0 %v1435
        %v1503 = vpop.f32.mrb[0].mxu0
        %v1504 = vadd.f32 0.0, %v1503
        %v1505 = vpop.f32.mrb[0].mxu0
        %1506 = vdwg.mxu0
        %v1507 = vsel %vm1016, %v1200, 0
        %1509 = vmatprep.subr.mxu0 0.0
        %1510 = vmatpush1.msra.mxu0 %v547
        %1511 = vmatprep.subr.mxu0 0.0
        %1512 = vmatpush1.msra.mxu0 0.0
        %1513 = vmatprep.subr.mxu0 0.0
        %1514 = vmatpush1.msra.mxu0 0.0
        %1515 = vmatprep.subr.mxu0 0.0
        %1516 = vmatpush1.msra.mxu0 0.0
        %1517 = vmatprep.subr.mxu0 0.0
        %1518 = vmatpush1.msra.mxu0 0.0
        %1519 = vmatprep.subr.mxu0 0.0
        %1520 = vmatpush1.msra.mxu0 0.0
        %1521 = vmatprep.subr.mxu0 0.0
        %1522 = vmatpush1.msra.mxu0 0.0
        %1523 = vmatprep.subr.mxu0 0.0
        %1524 = vmatpush1.msra.mxu0 0.0
        %1525 = vmatprep.subr.mxu0 0.0
        %1526 = vmatpush1.msra.mxu0 0.0
        %1527 = vmatprep.subr.mxu0 0.0
        %1528 = vmatpush1.msra.mxu0 0.0
        %1529 = vmatprep.subr.mxu0 0.0
        %1530 = vmatpush1.msra.mxu0 0.0
        %1531 = vmatprep.subr.mxu0 0.0
        %1532 = vmatpush1.msra.mxu0 0.0
        %1533 = vmatprep.subr.mxu0 0.0
        %1534 = vmatpush1.msra.mxu0 0.0
        %1535 = vmatprep.subr.mxu0 0.0
        %1536 = vmatpush1.msra.mxu0 0.0
        %1537 = vmatprep.subr.mxu0 0.0
        %1538 = vmatpush1.msra.mxu0 0.0
        %1539 = vmatprep.subr.mxu0 0.0
        %1540 = vmatpush1.msra.mxu0 0.0
        %1541 = vmatprep.subr.mxu0 0.0
        %1542 = vmatpush1.msra.mxu0 0.0
        %1543 = vmatprep.subr.mxu0 0.0
        %1544 = vmatpush1.msra.mxu0 0.0
        %1545 = vmatprep.subr.mxu0 0.0
        %1546 = vmatpush1.msra.mxu0 0.0
        %1547 = vmatprep.subr.mxu0 0.0
        %1548 = vmatpush1.msra.mxu0 0.0
        %1549 = vmatprep.subr.mxu0 0.0
        %1550 = vmatpush1.msra.mxu0 0.0
        %1551 = vmatprep.subr.mxu0 0.0
        %1552 = vmatpush1.msra.mxu0 0.0
        %1553 = vmatprep.subr.mxu0 0.0
        %1554 = vmatpush1.msra.mxu0 0.0
        %1555 = vmatprep.subr.mxu0 0.0
        %1556 = vmatpush1.msra.mxu0 0.0
        %1557 = vmatprep.subr.mxu0 0.0
        %1558 = vmatpush1.msra.mxu0 0.0
        %1559 = vmatprep.subr.mxu0 0.0
        %1560 = vmatpush1.msra.mxu0 0.0
        %1561 = vmatprep.subr.mxu0 0.0
        %1562 = vmatpush1.msra.mxu0 0.0
        %1563 = vmatprep.subr.mxu0 0.0
        %1564 = vmatpush1.msra.mxu0 0.0
        %1565 = vmatprep.subr.mxu0 0.0
        %1566 = vmatpush1.msra.mxu0 0.0
        %1567 = vmatprep.subr.mxu0 0.0
        %1568 = vmatpush1.msra.mxu0 0.0
        %1569 = vmatprep.subr.mxu0 0.0
        %1570 = vmatpush1.msra.mxu0 0.0
        %1571 = vmatprep.subr.mxu0 0.0
        %1572 = vmatpush1.msra.mxu0 0.0
        %1573 = vmatprep.mubr.f32.mxu0 0.0
        %1574 = vmatmul.mubr.f32.gmra.mrb[0].mxu0 %v1507
        %v1575 = vpop.f32.mrb[0].mxu0
        %v1576 = vadd.f32 0.0, %v1575
        %v1577 = vpop.f32.mrb[0].mxu0
        %1578 = vdwg.mxu0
        %v1579 = vsel %vm1016, %v1214, 0
        %1581 = vmatprep.subr.mxu0 0.0
        %1582 = vmatpush1.msra.mxu0 %v548
        %1583 = vmatprep.subr.mxu0 0.0
        %1584 = vmatpush1.msra.mxu0 0.0
        %1585 = vmatprep.subr.mxu0 0.0
        %1586 = vmatpush1.msra.mxu0 0.0
        %1587 = vmatprep.subr.mxu0 0.0
        %1588 = vmatpush1.msra.mxu0 0.0
        %1589 = vmatprep.subr.mxu0 0.0
        %1590 = vmatpush1.msra.mxu0 0.0
        %1591 = vmatprep.subr.mxu0 0.0
        %1592 = vmatpush1.msra.mxu0 0.0
        %1593 = vmatprep.subr.mxu0 0.0
        %1594 = vmatpush1.msra.mxu0 0.0
        %1595 = vmatprep.subr.mxu0 0.0
        %1596 = vmatpush1.msra.mxu0 0.0
        %1597 = vmatprep.subr.mxu0 0.0
        %1598 = vmatpush1.msra.mxu0 0.0
        %1599 = vmatprep.subr.mxu0 0.0
        %1600 = vmatpush1.msra.mxu0 0.0
        %1601 = vmatprep.subr.mxu0 0.0
        %1602 = vmatpush1.msra.mxu0 0.0
        %1603 = vmatprep.subr.mxu0 0.0
        %1604 = vmatpush1.msra.mxu0 0.0
        %1605 = vmatprep.subr.mxu0 0.0
        %1606 = vmatpush1.msra.mxu0 0.0
        %1607 = vmatprep.subr.mxu0 0.0
        %1608 = vmatpush1.msra.mxu0 0.0
        %1609 = vmatprep.subr.mxu0 0.0
        %1610 = vmatpush1.msra.mxu0 0.0
        %1611 = vmatprep.subr.mxu0 0.0
        %1612 = vmatpush1.msra.mxu0 0.0
        %1613 = vmatprep.subr.mxu0 0.0
        %1614 = vmatpush1.msra.mxu0 0.0
        %1615 = vmatprep.subr.mxu0 0.0
        %1616 = vmatpush1.msra.mxu0 0.0
        %1617 = vmatprep.subr.mxu0 0.0
        %1618 = vmatpush1.msra.mxu0 0.0
        %1619 = vmatprep.subr.mxu0 0.0
        %1620 = vmatpush1.msra.mxu0 0.0
        %1621 = vmatprep.subr.mxu0 0.0
        %1622 = vmatpush1.msra.mxu0 0.0
        %1623 = vmatprep.subr.mxu0 0.0
        %1624 = vmatpush1.msra.mxu0 0.0
        %1625 = vmatprep.subr.mxu0 0.0
        %1626 = vmatpush1.msra.mxu0 0.0
        %1627 = vmatprep.subr.mxu0 0.0
        %1628 = vmatpush1.msra.mxu0 0.0
        %1629 = vmatprep.subr.mxu0 0.0
        %1630 = vmatpush1.msra.mxu0 0.0
        %1631 = vmatprep.subr.mxu0 0.0
        %1632 = vmatpush1.msra.mxu0 0.0
        %1633 = vmatprep.subr.mxu0 0.0
        %1634 = vmatpush1.msra.mxu0 0.0
        %1635 = vmatprep.subr.mxu0 0.0
        %1636 = vmatpush1.msra.mxu0 0.0
        %1637 = vmatprep.subr.mxu0 0.0
        %1638 = vmatpush1.msra.mxu0 0.0
        %1639 = vmatprep.subr.mxu0 0.0
        %1640 = vmatpush1.msra.mxu0 0.0
        %1641 = vmatprep.subr.mxu0 0.0
        %1642 = vmatpush1.msra.mxu0 0.0
        %1643 = vmatprep.subr.mxu0 0.0
        %1644 = vmatpush1.msra.mxu0 0.0
        %1645 = vmatprep.mubr.f32.mxu0 0.0
        %1646 = vmatmul.mubr.f32.gmra.mrb[0].mxu0 %v1579
        %v1647 = vpop.f32.mrb[0].mxu0
        %v1648 = vadd.f32 0.0, %v1647
        %v1649 = vpop.f32.mrb[0].mxu0
        %1650 = vdwg.mxu0
        %v1651 = vsel %vm1016, %v1216, 0
        %1653 = vmatprep.subr.mxu0 0.0
        %1654 = vmatpush1.msra.mxu0 %v549
        %1655 = vmatprep.subr.mxu0 0.0
        %1656 = vmatpush1.msra.mxu0 0.0
        %1657 = vmatprep.subr.mxu0 0.0
        %1658 = vmatpush1.msra.mxu0 0.0
        %1659 = vmatprep.subr.mxu0 0.0
        %1660 = vmatpush1.msra.mxu0 0.0
        %1661 = vmatprep.subr.mxu0 0.0
        %1662 = vmatpush1.msra.mxu0 0.0
        %1663 = vmatprep.subr.mxu0 0.0
        %1664 = vmatpush1.msra.mxu0 0.0
        %1665 = vmatprep.subr.mxu0 0.0
        %1666 = vmatpush1.msra.mxu0 0.0
        %1667 = vmatprep.subr.mxu0 0.0
        %1668 = vmatpush1.msra.mxu0 0.0
        %1669 = vmatprep.subr.mxu0 0.0
        %1670 = vmatpush1.msra.mxu0 0.0
        %1671 = vmatprep.subr.mxu0 0.0
        %1672 = vmatpush1.msra.mxu0 0.0
        %1673 = vmatprep.subr.mxu0 0.0
        %1674 = vmatpush1.msra.mxu0 0.0
        %1675 = vmatprep.subr.mxu0 0.0
        %1676 = vmatpush1.msra.mxu0 0.0
        %1677 = vmatprep.subr.mxu0 0.0
        %1678 = vmatpush1.msra.mxu0 0.0
        %1679 = vmatprep.subr.mxu0 0.0
        %1680 = vmatpush1.msra.mxu0 0.0
        %1681 = vmatprep.subr.mxu0 0.0
        %1682 = vmatpush1.msra.mxu0 0.0
        %1683 = vmatprep.subr.mxu0 0.0
        %1684 = vmatpush1.msra.mxu0 0.0
        %1685 = vmatprep.subr.mxu0 0.0
        %1686 = vmatpush1.msra.mxu0 0.0
        %1687 = vmatprep.subr.mxu0 0.0
        %1688 = vmatpush1.msra.mxu0 0.0
        %1689 = vmatprep.subr.mxu0 0.0
        %1690 = vmatpush1.msra.mxu0 0.0
        %1691 = vmatprep.subr.mxu0 0.0
        %1692 = vmatpush1.msra.mxu0 0.0
        %1693 = vmatprep.subr.mxu0 0.0
        %1694 = vmatpush1.msra.mxu0 0.0
        %1695 = vmatprep.subr.mxu0 0.0
        %1696 = vmatpush1.msra.mxu0 0.0
        %1697 = vmatprep.subr.mxu0 0.0
        %1698 = vmatpush1.msra.mxu0 0.0
        %1699 = vmatprep.subr.mxu0 0.0
        %1700 = vmatpush1.msra.mxu0 0.0
        %1701 = vmatprep.subr.mxu0 0.0
        %1702 = vmatpush1.msra.mxu0 0.0
        %1703 = vmatprep.subr.mxu0 0.0
        %1704 = vmatpush1.msra.mxu0 0.0
        %1705 = vmatprep.subr.mxu0 0.0
        %1706 = vmatpush1.msra.mxu0 0.0
        %1707 = vmatprep.subr.mxu0 0.0
        %1708 = vmatpush1.msra.mxu0 0.0
        %1709 = vmatprep.subr.mxu0 0.0
        %1710 = vmatpush1.msra.mxu0 0.0
        %1711 = vmatprep.subr.mxu0 0.0
        %1712 = vmatpush1.msra.mxu0 0.0
        %1713 = vmatprep.subr.mxu0 0.0
        %1714 = vmatpush1.msra.mxu0 0.0
        %1715 = vmatprep.subr.mxu0 0.0
        %1716 = vmatpush1.msra.mxu0 0.0
        %1717 = vmatprep.mubr.f32.mxu0 0.0
        %1718 = vmatmul.mubr.f32.gmra.mrb[0].mxu0 %v1651
        %v1719 = vpop.f32.mrb[0].mxu0
        %v1720 = vadd.f32 0.0, %v1719
        %v1721 = vpop.f32.mrb[0].mxu0
        %1722 = vdwg.mxu0
        %v1723 = vsel %vm1016, %v1218, 0
        %1725 = vmatprep.subr.mxu0 0.0
        %1726 = vmatpush1.msra.mxu0 %v550
        %1727 = vmatprep.subr.mxu0 0.0
        %1728 = vmatpush1.msra.mxu0 0.0
        %1729 = vmatprep.subr.mxu0 0.0
        %1730 = vmatpush1.msra.mxu0 0.0
        %1731 = vmatprep.subr.mxu0 0.0
        %1732 = vmatpush1.msra.mxu0 0.0
        %1733 = vmatprep.subr.mxu0 0.0
        %1734 = vmatpush1.msra.mxu0 0.0
        %1735 = vmatprep.subr.mxu0 0.0
        %1736 = vmatpush1.msra.mxu0 0.0
        %1737 = vmatprep.subr.mxu0 0.0
        %1738 = vmatpush1.msra.mxu0 0.0
        %1739 = vmatprep.subr.mxu0 0.0
        %1740 = vmatpush1.msra.mxu0 0.0
        %1741 = vmatprep.subr.mxu0 0.0
        %1742 = vmatpush1.msra.mxu0 0.0
        %1743 = vmatprep.subr.mxu0 0.0
        %1744 = vmatpush1.msra.mxu0 0.0
        %1745 = vmatprep.subr.mxu0 0.0
        %1746 = vmatpush1.msra.mxu0 0.0
        %1747 = vmatprep.subr.mxu0 0.0
        %1748 = vmatpush1.msra.mxu0 0.0
        %1749 = vmatprep.subr.mxu0 0.0
        %1750 = vmatpush1.msra.mxu0 0.0
        %1751 = vmatprep.subr.mxu0 0.0
        %1752 = vmatpush1.msra.mxu0 0.0
        %1753 = vmatprep.subr.mxu0 0.0
        %1754 = vmatpush1.msra.mxu0 0.0
        %1755 = vmatprep.subr.mxu0 0.0
        %1756 = vmatpush1.msra.mxu0 0.0
        %1757 = vmatprep.subr.mxu0 0.0
        %1758 = vmatpush1.msra.mxu0 0.0
        %1759 = vmatprep.subr.mxu0 0.0
        %1760 = vmatpush1.msra.mxu0 0.0
        %1761 = vmatprep.subr.mxu0 0.0
        %1762 = vmatpush1.msra.mxu0 0.0
        %1763 = vmatprep.subr.mxu0 0.0
        %1764 = vmatpush1.msra.mxu0 0.0
        %1765 = vmatprep.subr.mxu0 0.0
        %1766 = vmatpush1.msra.mxu0 0.0
        %1767 = vmatprep.subr.mxu0 0.0
        %1768 = vmatpush1.msra.mxu0 0.0
        %1769 = vmatprep.subr.mxu0 0.0
        %1770 = vmatpush1.msra.mxu0 0.0
        %1771 = vmatprep.subr.mxu0 0.0
        %1772 = vmatpush1.msra.mxu0 0.0
        %1773 = vmatprep.subr.mxu0 0.0
        %1774 = vmatpush1.msra.mxu0 0.0
        %1775 = vmatprep.subr.mxu0 0.0
        %1776 = vmatpush1.msra.mxu0 0.0
        %1777 = vmatprep.subr.mxu0 0.0
        %1778 = vmatpush1.msra.mxu0 0.0
        %1779 = vmatprep.subr.mxu0 0.0
        %1780 = vmatpush1.msra.mxu0 0.0
        %1781 = vmatprep.subr.mxu0 0.0
        %1782 = vmatpush1.msra.mxu0 0.0
        %1783 = vmatprep.subr.mxu0 0.0
        %1784 = vmatpush1.msra.mxu0 0.0
        %1785 = vmatprep.subr.mxu0 0.0
        %1786 = vmatpush1.msra.mxu0 0.0
        %1787 = vmatprep.subr.mxu0 0.0
        %1788 = vmatpush1.msra.mxu0 0.0
        %1789 = vmatprep.mubr.f32.mxu0 0.0
        %1790 = vmatmul.mubr.f32.gmra.mrb[0].mxu0 %v1723
        %v1791 = vpop.f32.mrb[0].mxu0
        %v1792 = vadd.f32 0.0, %v1791
        %v1793 = vpop.f32.mrb[0].mxu0
        %1794 = vdwg.mxu0
        %v1795 = vpack.c.bf16 %v1166, %v1166
        %v1796 = vpack.c.bf16 %v1288, %v1288
        %v1797 = vpack.c.bf16 %v1360, %v1360
        %v1798 = vpack.c.bf16 %v1432, %v1432
        %v1799 = vpack.c.bf16 %v1504, %v1504
        %v1800 = vpack.c.bf16 %v1576, %v1576
        %v1801 = vpack.c.bf16 %v1648, %v1648
        %v1802 = vpack.c.bf16 %v1720, %v1720
        %v1803 = vpack.c.bf16 %v1792, %v1792
        %1805 = vrot.lane.b32.xlu0 %v1795, 32
        %v1806 = vpop.permute.xlu0 %1805
        %v1815 = vunpack.c.l.b16 %v1796
        %v1816 = vunpack.c.l.b16 %v1797
        %v1817 = vunpack.c.l.b16 %v1798
        %v1818 = vunpack.c.l.b16 %v1799
        %v1819 = vunpack.c.l.b16 %v1800
        %v1820 = vunpack.c.l.b16 %v1801
        %v1821 = vunpack.c.l.b16 %v1802
        %v1822 = vunpack.c.l.b16 %v1803
        %v1823 = vrot.slane %v1816, 7
        %v1824 = vsel %vm1000, %v1823, %v1815
        %v1825 = vrot.slane %v1817, 6
        %v1826 = vsel %vm1002, %v1825, %v1824
        %v1827 = vrot.slane %v1818, 5
        %v1828 = vsel %vm1004, %v1827, %v1826
        %v1829 = vrot.slane %v1819, 4
        %v1830 = vsel %vm1006, %v1829, %v1828
        %v1831 = vrot.slane %v1820, 3
        %v1832 = vsel %vm1008, %v1831, %v1830
        %v1833 = vrot.slane %v1821, 2
        %v1834 = vsel %vm1010, %v1833, %v1832
        %v1835 = vrot.slane %v1822, 1
        %v1836 = vsel %vm1012, %v1835, %v1834
        %v1837 = vpack.c.b16 %v1836, %v1836
        %1838 = vrot.lane.b32.xlu0 %v1837, 64
        %v1839 = vpop.permute.xlu0 %1838
        %v1841 = vsel %vm572, %v551, %v1806
        %vm1842 = vcmask 523264
        %v1844 = vsel %vm1842, %v1841, %v1839
        %v1845 = vld [vmem:[%s7] sm:$0xf]
        %v1846 = vld [vmem:[%s7 + $0x4] sm:$0xf]
        %v1847 = vld [vmem:[%s7 + $0x8] sm:$0xf]
        %v1848 = vld [vmem:[%s7 + $0xc] sm:$0xf]
        %v1849 = vld [vmem:[%s7 + $0x10] sm:$0xf]
        %v1850 = vld [vmem:[%s7 + $0x14] sm:$0xf]
        %v1851 = vld [vmem:[%s7 + $0x18] sm:$0xf]
        %v1852 = vld [vmem:[%s7 + $0x1c] sm:$0xf]
        %v1853 = vld [vmem:[%s7 + $0x20] sm:$0xf]
        %v1854 = vld [vmem:[%s7 + $0x24] sm:$0xf]
        %v1855 = vld [vmem:[%s7 + $0x28] sm:$0xf]
        %v1856 = vld [vmem:[%s7 + $0x2c] sm:$0xf]
        %v1857 = vlaneseq
        %v1858 = vshrl.u32 %v1857, 7
        %v1859 = vsub.s32 0, %v1858
        %v1860 = vrot.slane %v379, %v1859
        %v1873 = vunpack.c.l.b16 %v1845
        %v1874 = vunpack.c.l.b16 %v1846
        %v1875 = vunpack.c.l.b16 %v1847
        %v1876 = vunpack.c.l.b16 %v1848
        %v1877 = vunpack.c.l.b16 %v1849
        %v1878 = vunpack.c.l.b16 %v1850
        %v1879 = vunpack.c.l.b16 %v1851
        %v1880 = vunpack.c.l.b16 %v1852
        %v1881 = vunpack.c.l.b16 %v1853
        %v1882 = vunpack.c.l.b16 %v1854
        %v1883 = vunpack.c.l.b16 %v1855
        %v1884 = vunpack.c.l.b16 %v1856
        %v1885 = vpack.c.b16 %v1874, %v1873
        %v1886 = vpack.c.b16 %v1876, %v1875
        %v1887 = vpack.c.b16 %v1878, %v1877
        %v1888 = vpack.c.b16 %v1880, %v1879
        %v1889 = vpack.c.b16 %v1882, %v1881
        %v1890 = vpack.c.b16 %v1884, %v1883
        %vm1897 = vcmask 785408
        %v1898 = vsel %vm1897, %v1844, 0
        %1900 = vmatprep.subr.bf16.mxu0 0
        %1901 = vmatpush1.bf16.msra.mxu0 %v1885
        %1902 = vmatprep.subr.bf16.mxu0 0
        %1903 = vmatpush1.bf16.msra.mxu0 %v1886
        %1904 = vmatprep.subr.bf16.mxu0 0
        %1905 = vmatpush1.bf16.msra.mxu0 %v1887
        %1906 = vmatprep.subr.bf16.mxu0 0
        %1907 = vmatpush1.bf16.msra.mxu0 %v1888
        %1908 = vmatprep.subr.bf16.mxu0 0
        %1909 = vmatpush1.bf16.msra.mxu0 %v1889
        %1910 = vmatprep.subr.bf16.mxu0 0
        %1911 = vmatpush1.bf16.msra.mxu0 %v1890
        %1912 = vmatprep.subr.bf16.mxu0 0
        %1913 = vmatpush1.bf16.msra.mxu0 0
        %1914 = vmatprep.subr.bf16.mxu0 0
        %1915 = vmatpush1.bf16.msra.mxu0 0
        %1916 = vmatprep.subr.bf16.mxu0 0
        %1917 = vmatpush1.bf16.msra.mxu0 0
        %1918 = vmatprep.subr.bf16.mxu0 0
        %1919 = vmatpush1.bf16.msra.mxu0 0
        %1920 = vmatprep.subr.bf16.mxu0 0
        %1921 = vmatpush1.bf16.msra.mxu0 0
        %1922 = vmatprep.subr.bf16.mxu0 0
        %1923 = vmatpush1.bf16.msra.mxu0 0
        %1924 = vmatprep.subr.bf16.mxu0 0
        %1925 = vmatpush1.bf16.msra.mxu0 0
        %1926 = vmatprep.subr.bf16.mxu0 0
        %1927 = vmatpush1.bf16.msra.mxu0 0
        %1928 = vmatprep.subr.bf16.mxu0 0
        %1929 = vmatpush1.bf16.msra.mxu0 0
        %1930 = vmatprep.subr.bf16.mxu0 0
        %1931 = vmatpush1.bf16.msra.mxu0 0
        %1932 = vmatprep.mubr.bf16.mxu0 0
        %1933 = vmatmul.mubr.bf16.gmra.mrb[0].mxu0 %v1898
        %v1934 = vpop.f32.mrb[0].mxu0
        %v1935 = vadd.f32 %v1860, %v1934
        %v1936 = vpop.f32.mrb[0].mxu0
        %v1937 = vpop.f32.mrb[0].mxu0
        %v1938 = vpop.f32.mrb[0].mxu0
        %1939 = vdwg.mxu0
        %v1940 = vmax.f32 %v1935, 0.0
        %1941 = vst.msk [vmem:[%s351] sm:$0xff] %vm572, %v1940
        %s1942 = sand.u32 %s235, 1
        %s1943 = scalar_lea.sflag [#allocation3], %s1942
        %s1944 = sand.u32 %s235, 1
        %s1945 = smul.addr %s1944, 8
        %s1946 = scalar_lea.vmem [#allocation2], %s1945
        // Predicated region
        $region57: #{tpu_custom_call.1} parent=55 // pred_check
          %p1947 = pneg %p245
        $region58: #{tpu_custom_call.1} parent=55 // pred_check_branch
          %1949 = sbr.rel (%p1947) target = $region60
        $region59: #{tpu_custom_call.1} parent=55 // pred_region
          %s1951 = ssub.s32 128, 128
          %1952 = vsyncadd %s1943, %s1951
          %s1953 = smul.addr %s23, 128
          %s1954 = scalar_lea.hbm %s9, %s1953
          %s1956 = sshll.u32 %s1946, 4
          %s1957 = int_to_ptr.vmem [resolvable:$true] %s1956
          %1959 = dma.vmem_to_hbm [thread:$0]  %s1957, 128, %s1954, %s1943
        $region60: #{tpu_custom_call.1} parent=55 // pred_fallthru
          _
      $region56: #{tpu_custom_call.1} parent=5 // pred_fallthru
        _
      %p1960 = scmp.le.s32.totalorder 2, %s18
      // Predicated region
      $region61: #{tpu_custom_call.1} parent=5 // pred_check
        %p1961 = pneg %p1960
      $region62: #{tpu_custom_call.1} parent=5 // pred_check_branch
        %1963 = sbr.rel (%p1961) target = $region64
      $region63: #{tpu_custom_call.1} parent=5 // pred_region
        %s1964 = ssub.s32 %s18, 2
        // Predicated region
        $region65: #{tpu_custom_call.1} parent=63 // pred_check
          %p1965 = pneg %p251
        $region66: #{tpu_custom_call.1} parent=63 // pred_check_branch
          %1967 = sbr.rel (%p1965) target = $region68
        $region67: #{tpu_custom_call.1} parent=63 // pred_region
          %s1968 = sand.u32 %s236, 1
          %s1969 = scalar_lea.sflag [#allocation3], %s1968
          %s1970 = sand.u32 %s236, 1
          %s1971 = smul.addr %s1970, 8
          %s1972 = scalar_lea.vmem [#allocation2], %s1971
          %1973 = dma.done %s1969, 128
        $region68: #{tpu_custom_call.1} parent=63 // pred_fallthru
          _
      $region64: #{tpu_custom_call.1} parent=5 // pred_fallthru
        _
    $region6: #{tpu_custom_call.1} parent=1 // loop_footer
      %s22 = sadd.s32 1, %s18
    $region7: #{tpu_custom_call.1} parent=1 // loop_footer_branch
      %17 = sbr.rel target = $region3
    $region8: #{tpu_custom_call.1} parent=1 // loop_exit
      _
    %1974 = vsyncpa [#allocation3], 1
    %s1975 = scalar_lea.sflag [#allocation3], 1
    %1976 = vsyncpa %s1975, 1

</llo_original>
